<compile_context>
chip_gen: v5e
topology: v5e:2x2
jax: 0.10.0
libtpu: 0.0.40
codegen_flags: <defaults>
</compile_context>

<pallas_src>
import functools

import jax
import jax.numpy as jnp
from jax.experimental import pallas as pl
from jax.experimental.pallas import tpu as pltpu

LANE = 128
NODE_PAD = 256                       # N padding granularity (decoupled from tiles)
TILE_CANDIDATES = (2048, 1024, 512, 256, 128)
VMEM_CAP = 56 << 20                  # stay under v7x's 64 MiB physical VMEM


def _round_up(v, m):
    return (v + m - 1) // m * m


def _pad2(a, rows, cols):
    return jnp.pad(a, ((0, rows - a.shape[0]), (0, cols - a.shape[1])))


def _vmem_limit(need_bytes):
    return int(min(max(int(need_bytes * 1.25) + (2 << 20), 4 << 20), VMEM_CAP))


def _pick_tiles(n):
    """Padded node count + (tm, tk) tiles.

    n_pad is a multiple of 256; tm/tk are the largest 128-aligned divisors of
    n_pad from TILE_CANDIDATES.  tm is capped at n_pad//2 so the 'parallel' row
    grid keeps >= 2 tiles (both v7x TensorCores stay busy).
    """
    n_pad = _round_up(n, NODE_PAD)

    def largest_divisor(cap):
        for c in TILE_CANDIDATES:
            if c <= cap and n_pad % c == 0:
                return c
        return LANE

    tm = largest_divisor(max(n_pad // 2, LANE))
    tk = largest_divisor(n_pad)
    return n_pad, tm, tk


def prepare_adj(adj, n_pad, dtype=jnp.bfloat16):
    """Pad + bf16-cast the normalized adjacency ONCE; reuse across forward calls."""
    return _pad2(adj, n_pad, n_pad).astype(dtype)


# ---------------------------------------------------------------------------
# Kernel 1: feature transform  xw = x @ w  (small pass, hoisted out of adj loop)
# ---------------------------------------------------------------------------
def _transform_kernel(x_ref, w_ref, o_ref, *, compute_dtype):
    xw = jnp.dot(
        x_ref[...].astype(compute_dtype),
        w_ref[...].astype(compute_dtype),
        preferred_element_type=jnp.float32,
    )
    o_ref[...] = xw.astype(o_ref.dtype)


def feature_transform(x, w, *, tm, compute_dtype, out_dtype):
    n_pad, f_in_pad = x.shape
    f_out_pad = w.shape[1]
    kernel = functools.partial(_transform_kernel, compute_dtype=compute_dtype)
    need = (
        2 * tm * f_in_pad * 4
        + 2 * f_in_pad * f_out_pad * 4
        + 2 * tm * f_out_pad * jnp.dtype(out_dtype).itemsize
    )
    return pl.pallas_call(
        kernel,
        out_shape=jax.ShapeDtypeStruct((n_pad, f_out_pad), out_dtype),
        grid_spec=pltpu.PrefetchScalarGridSpec(
            num_scalar_prefetch=0,
            grid=(n_pad // tm,),
            in_specs=[
                pl.BlockSpec((tm, f_in_pad), lambda i: (i, 0)),
                pl.BlockSpec((f_in_pad, f_out_pad), lambda i: (0, 0)),
            ],
            out_specs=pl.BlockSpec((tm, f_out_pad), lambda i: (i, 0)),
        ),
        compiler_params=pltpu.CompilerParams(
            dimension_semantics=("parallel",),
            vmem_limit_bytes=_vmem_limit(need),
        ),
    )(x, w)


# ---------------------------------------------------------------------------
# Kernel 2: fused layer-1 aggregation + layer-2 transform
#   out = (relu(adj @ xw1 + b1)).bf16 @ w2      (h1 never touches HBM)
# ---------------------------------------------------------------------------
def _agg_fused_kernel(adj_ref, xw_ref, b_ref, w2_ref, o_ref, acc_ref):
    k = pl.program_id(1)

    @pl.when(k == 0)
    def _():
        acc_ref[...] = jnp.zeros_like(acc_ref)

    acc_ref[...] += jnp.dot(
        adj_ref[...], xw_ref[...], preferred_element_type=jnp.float32
    )

    @pl.when(k == pl.num_programs(1) - 1)
    def _():
        h = jnp.maximum(acc_ref[...] + b_ref[...], 0.0)           # f32 epilogue
        xw2 = jnp.dot(
            h.astype(w2_ref.dtype), w2_ref[...],
            preferred_element_type=jnp.float32,
        )
        o_ref[...] = xw2.astype(o_ref.dtype)


def aggregate_fused_transform(adj, xw, b1, w2, *, tm, tk, out_dtype):
    n_pad = adj.shape[0]
    hid_pad = xw.shape[1]
    out_pad = w2.shape[1]
    assert n_pad % tm == 0 and n_pad % tk == 0
    need = (
        2 * tm * tk * jnp.dtype(adj.dtype).itemsize              # adj double buffer
        + 2 * tk * hid_pad * jnp.dtype(xw.dtype).itemsize        # xw double buffer
        + 2 * tm * out_pad * jnp.dtype(out_dtype).itemsize       # out double buffer
        + tm * hid_pad * 4                                       # f32 accumulator
        + 2 * hid_pad * out_pad * jnp.dtype(w2.dtype).itemsize   # resident w2
        + 2 * hid_pad * 4                                        # bias
    )
    return pl.pallas_call(
        _agg_fused_kernel,
        out_shape=jax.ShapeDtypeStruct((n_pad, out_pad), out_dtype),
        grid_spec=pltpu.PrefetchScalarGridSpec(
            num_scalar_prefetch=0,
            grid=(n_pad // tm, n_pad // tk),       # reduction axis last
            in_specs=[
                pl.BlockSpec((tm, tk), lambda i, k: (i, k)),
                pl.BlockSpec((tk, hid_pad), lambda i, k: (k, 0)),
                pl.BlockSpec((1, hid_pad), lambda i, k: (0, 0)),
                pl.BlockSpec((hid_pad, out_pad), lambda i, k: (0, 0)),
            ],
            out_specs=pl.BlockSpec((tm, out_pad), lambda i, k: (i, 0)),
            scratch_shapes=[pltpu.VMEM((tm, hid_pad), jnp.float32)],
        ),
        compiler_params=pltpu.CompilerParams(
            dimension_semantics=("parallel", "arbitrary"),
            vmem_limit_bytes=_vmem_limit(need),
        ),
    )(adj, xw, b1, w2)


# ---------------------------------------------------------------------------
# Kernel 3: plain aggregation  out = act(adj @ xw + b)   (layer 2)
# ---------------------------------------------------------------------------
def _aggregate_kernel(adj_ref, xw_ref, b_ref, o_ref, acc_ref, *, apply_relu):
    k = pl.program_id(1)

    @pl.when(k == 0)
    def _():
        acc_ref[...] = jnp.zeros_like(acc_ref)

    acc_ref[...] += jnp.dot(
        adj_ref[...], xw_ref[...], preferred_element_type=jnp.float32
    )

    @pl.when(k == pl.num_programs(1) - 1)
    def _():
        h = acc_ref[...] + b_ref[...]
        if apply_relu:
            h = jnp.maximum(h, 0.0)
        o_ref[...] = h.astype(o_ref.dtype)


def aggregate(adj, xw, b, *, tm, tk, apply_relu, out_dtype=jnp.float32):
    n_pad = adj.shape[0]
    f_out_pad = xw.shape[1]
    assert n_pad % tm == 0 and n_pad % tk == 0
    kernel = functools.partial(_aggregate_kernel, apply_relu=apply_relu)
    need = (
        2 * tm * tk * jnp.dtype(adj.dtype).itemsize
        + 2 * tk * f_out_pad * jnp.dtype(xw.dtype).itemsize
        + 2 * tm * f_out_pad * jnp.dtype(out_dtype).itemsize
        + tm * f_out_pad * 4
        + 2 * f_out_pad * 4
    )
    return pl.pallas_call(
        kernel,
        out_shape=jax.ShapeDtypeStruct((n_pad, f_out_pad), out_dtype),
        grid_spec=pltpu.PrefetchScalarGridSpec(
            num_scalar_prefetch=0,
            grid=(n_pad // tm, n_pad // tk),       # reduction axis last
            in_specs=[
                pl.BlockSpec((tm, tk), lambda i, k: (i, k)),
                pl.BlockSpec((tk, f_out_pad), lambda i, k: (k, 0)),
                pl.BlockSpec((1, f_out_pad), lambda i, k: (0, 0)),
            ],
            out_specs=pl.BlockSpec((tm, f_out_pad), lambda i, k: (i, 0)),
            scratch_shapes=[pltpu.VMEM((tm, f_out_pad), jnp.float32)],
        ),
        compiler_params=pltpu.CompilerParams(
            dimension_semantics=("parallel", "arbitrary"),
            vmem_limit_bytes=_vmem_limit(need),
        ),
    )(adj, xw, b)


# ---------------------------------------------------------------------------
# GCN forward (adj_p is pre-padded / pre-cast via prepare_adj, hoisted)
# ---------------------------------------------------------------------------
def gcn_forward(x, adj_p, params, *, tm, tk):
    """h1 = relu(adj @ (x @ w1) + b1);  y = adj @ (h1 @ w2) + b2."""
    w1, b1, w2, b2 = params
    n = x.shape[0]
    f_in, hid = w1.shape
    out_ch = w2.shape[1]
    n_pad = adj_p.shape[0]
    agg_dtype = adj_p.dtype

    f_in_pad = _round_up(f_in, LANE)
    hid_pad = _round_up(hid, LANE)
    out_pad = _round_up(out_ch, LANE)

    x_p = _pad2(x.astype(jnp.float32), n_pad, f_in_pad)
    w1_p = _pad2(w1, f_in_pad, hid_pad).astype(jnp.float32)
    w2_p = _pad2(w2, hid_pad, out_pad).astype(agg_dtype)
    b1_p = jnp.pad(b1, (0, hid_pad - hid)).reshape(1, hid_pad).astype(jnp.float32)
    b2_p = jnp.pad(b2, (0, out_pad - out_ch)).reshape(1, out_pad).astype(jnp.float32)

    tm_t = min(tm, 512)  # transform pass is tiny; keep its VMEM footprint small

    # gc1 transform: xw1 = x @ w1 (bf16 out, feeds the HBM-bound aggregation)
    xw1 = feature_transform(x_p, w1_p, tm=tm_t, compute_dtype=agg_dtype,
                            out_dtype=agg_dtype)

    # gc1 aggregation fused with gc2 transform: xw2 = relu(adj@xw1 + b1) @ w2.
    # h1 stays in the f32 accumulator; never written to HBM.
    xw2 = aggregate_fused_transform(adj_p, xw1, b1_p, w2_p, tm=tm, tk=tk,
                                    out_dtype=agg_dtype)

    # gc2 aggregation: y = adj @ xw2 + b2 (dropout omitted -> eval-mode forward)
    y = aggregate(adj_p, xw2, b2_p, tm=tm, tk=tk, apply_relu=False,
                  out_dtype=jnp.float32)

    return y[:n, :out_ch]


# ---------------------------------------------------------------------------
# Parameter / input construction
# ---------------------------------------------------------------------------
def xavier_normal(key, fan_in, fan_out):
    std = (2.0 / (fan_in + fan_out)) ** 0.5
    return std * jax.random.normal(key, (fan_in, fan_out), dtype=jnp.float32)


def init_gcn_params(key, in_channels, hidden_channels, out_channels):
    k1, k2 = jax.random.split(key)
    w1 = xavier_normal(k1, in_channels, hidden_channels)
    b1 = jnp.zeros((hidden_channels,), jnp.float32)
    w2 = xavier_normal(k2, hidden_channels, out_channels)
    b2 = jnp.zeros((out_channels,), jnp.float32)
    return (w1, b1, w2, b2)


def make_normalized_adj(key, n):
    # Synthetic sparse-ish graph + self loops, symmetric D^-1/2 (A+I) D^-1/2.
    a = (jax.random.uniform(key, (n, n)) > 0.9).astype(jnp.float32)
    a = jnp.maximum(a, a.T)
    a = a + jnp.eye(n, dtype=jnp.float32)
    deg = jnp.sum(a, axis=1)
    d_inv_sqrt = 1.0 / jnp.sqrt(deg)
    return a * d_inv_sqrt[:, None] * d_inv_sqrt[None, :]


if __name__ == "__main__":
    N, IN_CH, HID_CH, OUT_CH = 128, 32, 64, 16

    root = jax.random.PRNGKey(0)
    k_x, k_adj, k_params = jax.random.split(root, 3)

    x = jax.random.normal(k_x, (N, IN_CH), dtype=jnp.float32)
    adj = make_normalized_adj(k_adj, N)
    params = init_gcn_params(k_params, IN_CH, HID_CH, OUT_CH)

    # Hoisted (done once, outside the jitted forward): pad + bf16 cast of adj.
    n_pad, tm, tk = _pick_tiles(N)
    adj_p = prepare_adj(adj, n_pad)

    fwd = jax.jit(functools.partial(gcn_forward, tm=tm, tk=tk))
    y = fwd(x, adj_p, params)
    jax.block_until_ready(y)
    assert y.shape == (N, OUT_CH)

    # Reference with matched numerics (bf16 MXU operands, f32 accumulation).
    def ref_matched(x, adj, params):
        hi = jax.lax.Precision.HIGHEST
        bf = lambda a: a.astype(jnp.bfloat16).astype(jnp.float32)
        w1, b1, w2, b2 = params
        adj_bf = bf(adj)
        xw1 = bf(jnp.dot(bf(x), bf(w1), precision=hi))
        h1 = jnp.maximum(jnp.dot(adj_bf, xw1, precision=hi) + b1, 0.0)
        xw2 = bf(jnp.dot(bf(h1), bf(w2), precision=hi))
        return jnp.dot(adj_bf, xw2, precision=hi) + b2

    y_matched = ref_matched(x, adj, params)
    assert jnp.allclose(y, y_matched, atol=1e-2, rtol=1e-2), float(
        jnp.max(jnp.abs(y - y_matched)))

    # Loose sanity check against the pure-f32 forward (bf16 adj/xw perturbs).
    w1, b1, w2, b2 = params
    h_f32 = jnp.maximum(adj @ (x @ w1) + b1, 0.0)
    y_f32 = adj @ (h_f32 @ w2) + b2
    assert jnp.allclose(y, y_f32, atol=1e-1, rtol=1e-1), float(
        jnp.max(jnp.abs(y - y_f32)))

    print("KERNEL_OK")
</pallas_src>

<mosaic_0001>
module attributes {stable_mosaic.version = 11 : i64} {
  func.func @_transform_kernel(%arg0: i32, %arg1: memref<128x128xf32, #tpu.memory_space<vmem>>, %arg2: memref<128x128xf32, #tpu.memory_space<vmem>>, %arg3: memref<128x128xbf16, #tpu.memory_space<vmem>>) attributes {dimension_semantics = [#tpu.dimension_semantics<parallel>], iteration_bounds = array<i64: 2>, scalar_prefetch = 0 : i64, scratch_operands = 0 : i64, tpu.core_type = #tpu.core_type<tc>, window_params = [{transform_indices = @transform_0, window_bounds = array<i64: 128, 128>}, {pipeline_mode = #tpu.pipeline_mode<synchronous>, transform_indices = @transform_1, window_bounds = array<i64: 128, 128>}, {transform_indices = @transform_2, window_bounds = array<i64: 128, 128>}]} {
    %c0 = arith.constant 0 : index
    %c0_0 = arith.constant 0 : index
    %0 = vector.load %arg1[%c0, %c0_0] : memref<128x128xf32, #tpu.memory_space<vmem>>, vector<128x128xf32>
    %1 = arith.truncf %0 : vector<128x128xf32> to vector<128x128xbf16>
    %c0_1 = arith.constant 0 : index
    %c0_2 = arith.constant 0 : index
    %2 = vector.load %arg2[%c0_1, %c0_2] : memref<128x128xf32, #tpu.memory_space<vmem>>, vector<128x128xf32>
    %3 = arith.truncf %2 : vector<128x128xf32> to vector<128x128xbf16>
    %cst = arith.constant dense<0.000000e+00> : vector<128x128xf32>
    %4 = tpu.matmul %1, %3, %cst {dimension_numbers = #tpu.dot_dimension_numbers<[1], [0], [0], [1], [0, 0, 1, 1], [], []>} : vector<128x128xbf16>, vector<128x128xbf16>, vector<128x128xf32> -> vector<128x128xf32>
    %5 = arith.truncf %4 : vector<128x128xf32> to vector<128x128xbf16>
    %c0_3 = arith.constant 0 : index
    %c0_4 = arith.constant 0 : index
    %6 = vector.load %arg3[%c0_3, %c0_4] : memref<128x128xbf16, #tpu.memory_space<vmem>>, vector<128x128xbf16>
    tpu.vector_store %arg3[%c0_3, %c0_4], %5 {strides = array<i32>} : memref<128x128xbf16, #tpu.memory_space<vmem>>, vector<128x128xbf16>,
    return
  }
  func.func @transform_0(%arg0: i32) -> (i32, i32) {
    %c0_i32 = arith.constant 0 : i32
    %c0_i32_0 = arith.constant 0 : i32
    return %arg0, %c0_i32 : i32, i32
  }
  func.func @transform_1(%arg0: i32) -> (i32, i32) {
    %c0_i32 = arith.constant 0 : i32
    %c0_i32_0 = arith.constant 0 : i32
    %c0_i32_1 = arith.constant 0 : i32
    return %c0_i32, %c0_i32_0 : i32, i32
  }
  func.func @transform_2(%arg0: i32) -> (i32, i32) {
    %c0_i32 = arith.constant 0 : i32
    %c0_i32_0 = arith.constant 0 : i32
    return %arg0, %c0_i32 : i32, i32
  }
}

module attributes {stable_mosaic.version = 11 : i64} {
  func.func @_agg_fused_kernel(%arg0: i32, %arg1: i32, %arg2: memref<128x256xbf16, #tpu.memory_space<vmem>>, %arg3: memref<256x128xbf16, #tpu.memory_space<vmem>>, %arg4: memref<1x128xf32, #tpu.memory_space<vmem>>, %arg5: memref<128x128xbf16, #tpu.memory_space<vmem>>, %arg6: memref<128x128xbf16, #tpu.memory_space<vmem>>, %arg7: memref<128x128xf32, #tpu.memory_space<vmem>>) attributes {dimension_semantics = [#tpu.dimension_semantics<parallel>, #tpu.dimension_semantics<arbitrary>], iteration_bounds = array<i64: 2, 1>, scalar_prefetch = 0 : i64, scratch_operands = 1 : i64, tpu.core_type = #tpu.core_type<tc>, window_params = [{transform_indices = @transform_0, window_bounds = array<i64: 128, 256>}, {transform_indices = @transform_1, window_bounds = array<i64: 256, 128>}, {pipeline_mode = #tpu.pipeline_mode<synchronous>, transform_indices = @transform_2, window_bounds = array<i64: 1, 128>}, {pipeline_mode = #tpu.pipeline_mode<synchronous>, transform_indices = @transform_3, window_bounds = array<i64: 128, 128>}, {transform_indices = @transform_4, window_bounds = array<i64: 128, 128>}]} {
    %c0_i32 = arith.constant 0 : i32
    %0 = arith.cmpi eq, %arg1, %c0_i32 : i32
    %1 = arith.extui %0 : i1 to i32
    %c0_i32_0 = arith.constant 0 : i32
    %2 = arith.cmpi ne, %1, %c0_i32_0 : i32
    scf.if %2 {
      %cst_10 = arith.constant 0.000000e+00 : f32
      %12 = vector.broadcast %cst_10 : f32 to vector<128x128xf32>
      %c0_11 = arith.constant 0 : index
      %c0_12 = arith.constant 0 : index
      %13 = vector.load %arg7[%c0_11, %c0_12] : memref<128x128xf32, #tpu.memory_space<vmem>>, vector<128x128xf32>
      tpu.vector_store %arg7[%c0_11, %c0_12], %12 {strides = array<i32>} : memref<128x128xf32, #tpu.memory_space<vmem>>, vector<128x128xf32>,
    } else {
    }
    %c0 = arith.constant 0 : index
    %c0_1 = arith.constant 0 : index
    %3 = vector.load %arg7[%c0, %c0_1] : memref<128x128xf32, #tpu.memory_space<vmem>>, vector<128x128xf32>
    %c0_2 = arith.constant 0 : index
    %c0_3 = arith.constant 0 : index
    %4 = vector.load %arg2[%c0_2, %c0_3] : memref<128x256xbf16, #tpu.memory_space<vmem>>, vector<128x256xbf16>
    %c0_4 = arith.constant 0 : index
    %c0_5 = arith.constant 0 : index
    %5 = vector.load %arg3[%c0_4, %c0_5] : memref<256x128xbf16, #tpu.memory_space<vmem>>, vector<256x128xbf16>
    %cst = arith.constant dense<0.000000e+00> : vector<128x128xf32>
    %6 = tpu.matmul %4, %5, %cst {dimension_numbers = #tpu.dot_dimension_numbers<[1], [0], [0], [1], [0, 0, 1, 1], [], []>} : vector<128x256xbf16>, vector<256x128xbf16>, vector<128x128xf32> -> vector<128x128xf32>
    %7 = arith.addf %3, %6 : vector<128x128xf32>
    %c0_6 = arith.constant 0 : index
    %c0_7 = arith.constant 0 : index
    %8 = vector.load %arg7[%c0_6, %c0_7] : memref<128x128xf32, #tpu.memory_space<vmem>>, vector<128x128xf32>
    tpu.vector_store %arg7[%c0_6, %c0_7], %7 {strides = array<i32>} : memref<128x128xf32, #tpu.memory_space<vmem>>, vector<128x128xf32>,
    %c0_i32_8 = arith.constant 0 : i32
    %9 = arith.cmpi eq, %arg1, %c0_i32_8 : i32
    %10 = arith.extui %9 : i1 to i32
    %c0_i32_9 = arith.constant 0 : i32
    %11 = arith.cmpi ne, %10, %c0_i32_9 : i32
    scf.if %11 {
      %c0_10 = arith.constant 0 : index
      %c0_11 = arith.constant 0 : index
      %12 = vector.load %arg7[%c0_10, %c0_11] : memref<128x128xf32, #tpu.memory_space<vmem>>, vector<128x128xf32>
      %c0_12 = arith.constant 0 : index
      %c0_13 = arith.constant 0 : index
      %13 = vector.load %arg4[%c0_12, %c0_13] : memref<1x128xf32, #tpu.memory_space<vmem>>, vector<1x128xf32>
      %14 = vector.broadcast %13 : vector<1x128xf32> to vector<128x128xf32>
      %15 = arith.addf %12, %14 : vector<128x128xf32>
      %cst_14 = arith.constant 0.000000e+00 : f32
      %16 = vector.broadcast %cst_14 : f32 to vector<128x128xf32>
      %17 = arith.maximumf %15, %16 : vector<128x128xf32>
      %18 = arith.truncf %17 : vector<128x128xf32> to vector<128x128xbf16>
      %c0_15 = arith.constant 0 : index
      %c0_16 = arith.constant 0 : index
      %19 = vector.load %arg5[%c0_15, %c0_16] : memref<128x128xbf16, #tpu.memory_space<vmem>>, vector<128x128xbf16>
      %cst_17 = arith.constant dense<0.000000e+00> : vector<128x128xf32>
      %20 = tpu.matmul %18, %19, %cst_17 {dimension_numbers = #tpu.dot_dimension_numbers<[1], [0], [0], [1], [0, 0, 1, 1], [], []>} : vector<128x128xbf16>, vector<128x128xbf16>, vector<128x128xf32> -> vector<128x128xf32>
      %21 = arith.truncf %20 : vector<128x128xf32> to vector<128x128xbf16>
      %c0_18 = arith.constant 0 : index
      %c0_19 = arith.constant 0 : index
      %22 = vector.load %arg6[%c0_18, %c0_19] : memref<128x128xbf16, #tpu.memory_space<vmem>>, vector<128x128xbf16>
      tpu.vector_store %arg6[%c0_18, %c0_19], %21 {strides = array<i32>} : memref<128x128xbf16, #tpu.memory_space<vmem>>, vector<128x128xbf16>,
    } else {
    }
    return
  }
  func.func @transform_0(%arg0: i32, %arg1: i32) -> (i32, i32) {
    %c0_i32 = arith.constant 0 : i32
    return %arg0, %arg1 : i32, i32
  }
  func.func @transform_1(%arg0: i32, %arg1: i32) -> (i32, i32) {
    %c0_i32 = arith.constant 0 : i32
    %c0_i32_0 = arith.constant 0 : i32
    return %arg1, %c0_i32 : i32, i32
  }
  func.func @transform_2(%arg0: i32, %arg1: i32) -> (i32, i32) {
    %c0_i32 = arith.constant 0 : i32
    %c0_i32_0 = arith.constant 0 : i32
    %c0_i32_1 = arith.constant 0 : i32
    return %c0_i32, %c0_i32_0 : i32, i32
  }
  func.func @transform_3(%arg0: i32, %arg1: i32) -> (i32, i32) {
    %c0_i32 = arith.constant 0 : i32
    %c0_i32_0 = arith.constant 0 : i32
    %c0_i32_1 = arith.constant 0 : i32
    return %c0_i32, %c0_i32_0 : i32, i32
  }
  func.func @transform_4(%arg0: i32, %arg1: i32) -> (i32, i32) {
    %c0_i32 = arith.constant 0 : i32
    %c0_i32_0 = arith.constant 0 : i32
    return %arg0, %c0_i32 : i32, i32
  }
}

module attributes {stable_mosaic.version = 11 : i64} {
  func.func @_aggregate_kernel(%arg0: i32, %arg1: i32, %arg2: memref<128x256xbf16, #tpu.memory_space<vmem>>, %arg3: memref<256x128xbf16, #tpu.memory_space<vmem>>, %arg4: memref<1x128xf32, #tpu.memory_space<vmem>>, %arg5: memref<128x128xf32, #tpu.memory_space<vmem>>, %arg6: memref<128x128xf32, #tpu.memory_space<vmem>>) attributes {dimension_semantics = [#tpu.dimension_semantics<parallel>, #tpu.dimension_semantics<arbitrary>], iteration_bounds = array<i64: 2, 1>, scalar_prefetch = 0 : i64, scratch_operands = 1 : i64, tpu.core_type = #tpu.core_type<tc>, window_params = [{transform_indices = @transform_0, window_bounds = array<i64: 128, 256>}, {transform_indices = @transform_1, window_bounds = array<i64: 256, 128>}, {pipeline_mode = #tpu.pipeline_mode<synchronous>, transform_indices = @transform_2, window_bounds = array<i64: 1, 128>}, {transform_indices = @transform_3, window_bounds = array<i64: 128, 128>}]} {
    %c0_i32 = arith.constant 0 : i32
    %0 = arith.cmpi eq, %arg1, %c0_i32 : i32
    %1 = arith.extui %0 : i1 to i32
    %c0_i32_0 = arith.constant 0 : i32
    %2 = arith.cmpi ne, %1, %c0_i32_0 : i32
    scf.if %2 {
      %cst_10 = arith.constant 0.000000e+00 : f32
      %12 = vector.broadcast %cst_10 : f32 to vector<128x128xf32>
      %c0_11 = arith.constant 0 : index
      %c0_12 = arith.constant 0 : index
      %13 = vector.load %arg6[%c0_11, %c0_12] : memref<128x128xf32, #tpu.memory_space<vmem>>, vector<128x128xf32>
      tpu.vector_store %arg6[%c0_11, %c0_12], %12 {strides = array<i32>} : memref<128x128xf32, #tpu.memory_space<vmem>>, vector<128x128xf32>,
    } else {
    }
    %c0 = arith.constant 0 : index
    %c0_1 = arith.constant 0 : index
    %3 = vector.load %arg6[%c0, %c0_1] : memref<128x128xf32, #tpu.memory_space<vmem>>, vector<128x128xf32>
    %c0_2 = arith.constant 0 : index
    %c0_3 = arith.constant 0 : index
    %4 = vector.load %arg2[%c0_2, %c0_3] : memref<128x256xbf16, #tpu.memory_space<vmem>>, vector<128x256xbf16>
    %c0_4 = arith.constant 0 : index
    %c0_5 = arith.constant 0 : index
    %5 = vector.load %arg3[%c0_4, %c0_5] : memref<256x128xbf16, #tpu.memory_space<vmem>>, vector<256x128xbf16>
    %cst = arith.constant dense<0.000000e+00> : vector<128x128xf32>
    %6 = tpu.matmul %4, %5, %cst {dimension_numbers = #tpu.dot_dimension_numbers<[1], [0], [0], [1], [0, 0, 1, 1], [], []>} : vector<128x256xbf16>, vector<256x128xbf16>, vector<128x128xf32> -> vector<128x128xf32>
    %7 = arith.addf %3, %6 : vector<128x128xf32>
    %c0_6 = arith.constant 0 : index
    %c0_7 = arith.constant 0 : index
    %8 = vector.load %arg6[%c0_6, %c0_7] : memref<128x128xf32, #tpu.memory_space<vmem>>, vector<128x128xf32>
    tpu.vector_store %arg6[%c0_6, %c0_7], %7 {strides = array<i32>} : memref<128x128xf32, #tpu.memory_space<vmem>>, vector<128x128xf32>,
    %c0_i32_8 = arith.constant 0 : i32
    %9 = arith.cmpi eq, %arg1, %c0_i32_8 : i32
    %10 = arith.extui %9 : i1 to i32
    %c0_i32_9 = arith.constant 0 : i32
    %11 = arith.cmpi ne, %10, %c0_i32_9 : i32
    scf.if %11 {
      %c0_10 = arith.constant 0 : index
      %c0_11 = arith.constant 0 : index
      %12 = vector.load %arg6[%c0_10, %c0_11] : memref<128x128xf32, #tpu.memory_space<vmem>>, vector<128x128xf32>
      %c0_12 = arith.constant 0 : index
      %c0_13 = arith.constant 0 : index
      %13 = vector.load %arg4[%c0_12, %c0_13] : memref<1x128xf32, #tpu.memory_space<vmem>>, vector<1x128xf32>
      %14 = vector.broadcast %13 : vector<1x128xf32> to vector<128x128xf32>
      %15 = arith.addf %12, %14 : vector<128x128xf32>
      %c0_14 = arith.constant 0 : index
      %c0_15 = arith.constant 0 : index
      %16 = vector.load %arg5[%c0_14, %c0_15] : memref<128x128xf32, #tpu.memory_space<vmem>>, vector<128x128xf32>
      tpu.vector_store %arg5[%c0_14, %c0_15], %15 {strides = array<i32>} : memref<128x128xf32, #tpu.memory_space<vmem>>, vector<128x128xf32>,
    } else {
    }
    return
  }
  func.func @transform_0(%arg0: i32, %arg1: i32) -> (i32, i32) {
    %c0_i32 = arith.constant 0 : i32
    return %arg0, %arg1 : i32, i32
  }
  func.func @transform_1(%arg0: i32, %arg1: i32) -> (i32, i32) {
    %c0_i32 = arith.constant 0 : i32
    %c0_i32_0 = arith.constant 0 : i32
    return %arg1, %c0_i32 : i32, i32
  }
  func.func @transform_2(%arg0: i32, %arg1: i32) -> (i32, i32) {
    %c0_i32 = arith.constant 0 : i32
    %c0_i32_0 = arith.constant 0 : i32
    %c0_i32_1 = arith.constant 0 : i32
    return %c0_i32, %c0_i32_0 : i32, i32
  }
  func.func @transform_3(%arg0: i32, %arg1: i32) -> (i32, i32) {
    %c0_i32 = arith.constant 0 : i32
    %c0_i32_0 = arith.constant 0 : i32
    return %arg0, %c0_i32 : i32, i32
  }
}

</mosaic_0001>

<llo_original>
// kernel: gcn_forward.3
$region0: #{gcn_forward.3}
  #allocation0 [shape = 'u32[]', space=smem, size = 0x4, offset = 0x4, fixed_abs, tag = 'smem constant byte address 0x4 - core index']
  #allocation1 [shape = 'u32[72,128]{1,0:T(1,128)}', space=vmem, size = 0x9000, scoped, tag = 'internal scratch']
  %s0 = inlined_call_operand.vmem [shape: f32[256,128], index: 0, kind: input, shape index: {}]
  %s1 = inlined_call_operand.vmem [shape: f32[128,128], index: 1, kind: input, shape index: {}]
  %s2 = inlined_call_operand.vmem [shape: bf16[256,128], index: 2, kind: output, shape index: {}]
  %s3 = sld [smem:[#allocation0]]
  $region41: #{gcn_forward.3} parent=0
    _
  %s5 = ssub.s32 1, %s3
  %s6 = scalar_select 0, %s5, %s3
  loop: start=0, step=1, limit=4
  $region2: #{gcn_forward.3} parent=0 // loop_pre_header
    _
  $region3: #{gcn_forward.3} parent=0 // loop_header
    %s8 = sphi 0, %s12
    %p9 = scmp.ge.s32.totalorder %s8, 4
    %s18 = sphi 0, %s20
    %s21 = sphi 0, %s18
    %s22 = sphi 0, %s21
    %s38 = sphi 0, %s22
    %s42 = sphi 0, %s42
    %s44 = sphi 0, %s42
    %s45 = sphi 0, %s44
    %s59 = sphi 0, %s45
    %s65 = sphi 0, %s67
    %s68 = sphi 0, %s65
    %s69 = sphi 0, %s68
    %s85 = sphi 0, %s69
  $region4: #{gcn_forward.3} parent=0 // loop_header_branch
    %11 = sbr.rel (%p9) target = $region8
  $region5: #{gcn_forward.3} parent=0 // loop_body
    %s13 = ssub.s32 %s8, 1
    %s14 = ssub.s32 %s8, 2
    %s15 = sadd.s32 %s8, 1
    %s16 = ssub.s32 %s8, %s15
    %p17 = scmp.eq.s32.totalorder %s16, 0
    %s19 = sadd.s32 %s18, 1
    %s20 = scalar_select %p17, %s18, %s19
    %p23 = pneg %p17
    %p24 = scmp.eq.s32.totalorder %s8, 1
    %p25 = por %p23, %p24
    %p26 = scmp.ne.s32.totalorder %s18, %s21
    %p27 = scmp.eq.s32.totalorder %s8, 0
    %p28 = por %p26, %p27
    %p29 = scmp.ne.s32.totalorder %s18, %s21
    %p30 = scmp.eq.s32.totalorder %s13, 1
    %p31 = por %p29, %p30
    %p32 = scmp.ne.s32.totalorder %s21, %s22
    %p33 = scmp.eq.s32.totalorder %s13, 0
    %p34 = por %p32, %p33
    %p35 = scmp.ne.s32.totalorder %s21, %s22
    %p36 = scmp.eq.s32.totalorder %s14, 1
    %p37 = por %p35, %p36
    %p39 = scmp.ne.s32.totalorder %s22, %s38
    %p40 = scmp.eq.s32.totalorder %s14, 0
    %p41 = por %p39, %p40
    %s43 = sadd.s32 %s42, 1
    %p46 = scmp.eq.s32.totalorder %s8, 1
    %p47 = scmp.ne.s32.totalorder %s42, %s44
    %p48 = scmp.eq.s32.totalorder %s8, 0
    %p49 = por %p47, %p48
    %p50 = scmp.ne.s32.totalorder %s42, %s44
    %p51 = scmp.eq.s32.totalorder %s13, 1
    %p52 = por %p50, %p51
    %p53 = scmp.ne.s32.totalorder %s44, %s45
    %p54 = scmp.eq.s32.totalorder %s13, 0
    %p55 = por %p53, %p54
    %p56 = scmp.ne.s32.totalorder %s44, %s45
    %p57 = scmp.eq.s32.totalorder %s14, 1
    %p58 = por %p56, %p57
    %p60 = scmp.ne.s32.totalorder %s45, %s59
    %p61 = scmp.eq.s32.totalorder %s14, 0
    %p62 = por %p60, %p61
    %s63 = ssub.s32 %s8, %s15
    %p64 = scmp.eq.s32.totalorder %s63, 0
    %s66 = sadd.s32 %s65, 1
    %s67 = scalar_select %p64, %s65, %s66
    %p70 = pneg %p64
    %p71 = scmp.eq.s32.totalorder %s8, 1
    %p72 = por %p70, %p71
    %p73 = scmp.ne.s32.totalorder %s65, %s68
    %p74 = scmp.eq.s32.totalorder %s8, 0
    %p75 = por %p73, %p74
    %p76 = scmp.ne.s32.totalorder %s65, %s68
    %p77 = scmp.eq.s32.totalorder %s13, 1
    %p78 = por %p76, %p77
    %p79 = scmp.ne.s32.totalorder %s68, %s69
    %p80 = scmp.eq.s32.totalorder %s13, 0
    %p81 = por %p79, %p80
    %p82 = scmp.ne.s32.totalorder %s68, %s69
    %p83 = scmp.eq.s32.totalorder %s14, 1
    %p84 = por %p82, %p83
    %p86 = scmp.ne.s32.totalorder %s69, %s85
    %p87 = scmp.eq.s32.totalorder %s14, 0
    %p88 = por %p86, %p87
    %p89 = scmp.le.s32.totalorder 1, %s8
    %p90 = scmp.lt.s32.totalorder %s8, 3
    %p91 = pnand %p89, %p90
    %p92 = pneg %p91
    // Predicated region
    $region9: #{gcn_forward.3} parent=5 // pred_check
      _
    $region10: #{gcn_forward.3} parent=5 // pred_check_branch
      %94 = sbr.rel (%p91) target = $region12
    $region11: #{gcn_forward.3} parent=5 // pred_region
      %s95 = ssub.s32 %s8, 1
      // Predicated region
      $region13: #{gcn_forward.3} parent=11 // pred_check
        %p96 = pneg %p55
      $region14: #{gcn_forward.3} parent=11 // pred_check_branch
        %98 = sbr.rel (%p96) target = $region16
      $region15: #{gcn_forward.3} parent=11 // pred_region
        _
      $region16: #{gcn_forward.3} parent=11 // pred_fallthru
        _
    $region12: #{gcn_forward.3} parent=5 // pred_fallthru
      _
    %p99 = scmp.lt.s32.totalorder %s8, 2
    // Predicated region
    $region17: #{gcn_forward.3} parent=5 // pred_check
      %p100 = pneg %p99
    $region18: #{gcn_forward.3} parent=5 // pred_check_branch
      %102 = sbr.rel (%p100) target = $region20
    $region19: #{gcn_forward.3} parent=5 // pred_region
      // Predicated region
      $region21: #{gcn_forward.3} parent=19 // pred_check
        %p103 = pneg %p28
      $region22: #{gcn_forward.3} parent=19 // pred_check_branch
        %105 = sbr.rel (%p103) target = $region24
      $region23: #{gcn_forward.3} parent=19 // pred_region
        %s106 = smul.u32 16, %s8
        %p107 = scmp.lt.s32.totalorder %s106, 31
        %s108 = scalar_select %p107, %s106, 31
        %s109 = smul.addr %s108, 8
        %s110 = scalar_lea.vmem %s0, %s109
        %s111 = smul.u32 16, %s8
      $region24: #{gcn_forward.3} parent=19 // pred_fallthru
        _
    $region20: #{gcn_forward.3} parent=5 // pred_fallthru
      _
    %p112 = scmp.le.s32.totalorder 1, %s8
    %p113 = scmp.lt.s32.totalorder %s8, 3
    %p114 = pnand %p112, %p113
    %p115 = pneg %p114
    // Predicated region
    $region25: #{gcn_forward.3} parent=5 // pred_check
      _
    $region26: #{gcn_forward.3} parent=5 // pred_check_branch
      %117 = sbr.rel (%p114) target = $region28
    $region27: #{gcn_forward.3} parent=5 // pred_region
      %s118 = ssub.s32 %s8, 1
      %s119 = smul.u32 16, %s13
      %p120 = scmp.lt.s32.totalorder %s119, 31
      %s121 = scalar_select %p120, %s119, 31
      %s122 = smul.addr %s121, 8
      %s123 = scalar_lea.vmem %s0, %s122
      %p124 = pneg %p34
      %p125 = pneg %p31
      %p126 = pneg %p55
      %p127 = pneg %p52
      %p128 = pneg %p81
      %p129 = pneg %p78
      %s130 = smul.u32 16, %s13
      %p131 = scmp.lt.s32.totalorder %s130, 31
      %s132 = scalar_select %p131, %s130, 31
      %s133 = smul.addr %s132, 4
      %s134 = scalar_lea.vmem %s2, %s133
      %s135 = smul.u32 16, %s13
      %p136 = scmp.lt.s32.totalorder %s135, 31
      %s137 = scalar_select %p136, %s135, 31
      %s138 = smul.addr %s137, 8
      %s139 = scalar_lea.vmem %s0, %s138
      %s140 = smul.u32 16, %s13
      %s141 = smul.u32 16, %s13
      %p142 = scmp.lt.s32.totalorder %s141, 31
      %s143 = scalar_select %p142, %s141, 31
      %s144 = smul.addr %s143, 4
      %s145 = scalar_lea.vmem %s2, %s144
      %s146 = smul.u32 16, %s13
      %v147 = vld [vmem:[%s139] sm:$0xff]
      %v148 = vld [vmem:[%s139 + $0x8] sm:$0xff]
      %v149 = vld [vmem:[%s139 + $0x10] sm:$0xff]
      %v150 = vld [vmem:[%s139 + $0x18] sm:$0xff]
      %v151 = vld [vmem:[%s139 + $0x20] sm:$0xff]
      %v152 = vld [vmem:[%s139 + $0x28] sm:$0xff]
      %v153 = vld [vmem:[%s139 + $0x30] sm:$0xff]
      %v154 = vld [vmem:[%s139 + $0x38] sm:$0xff]
      %v155 = vld [vmem:[%s139 + $0x40] sm:$0xff]
      %v156 = vld [vmem:[%s139 + $0x48] sm:$0xff]
      %v157 = vld [vmem:[%s139 + $0x50] sm:$0xff]
      %v158 = vld [vmem:[%s139 + $0x58] sm:$0xff]
      %v159 = vld [vmem:[%s139 + $0x60] sm:$0xff]
      %v160 = vld [vmem:[%s139 + $0x68] sm:$0xff]
      %v161 = vld [vmem:[%s139 + $0x70] sm:$0xff]
      %v162 = vld [vmem:[%s139 + $0x78] sm:$0xff]
      %v163 = vpack.c.bf16 %v148, %v147
      %v164 = vpack.c.bf16 %v150, %v149
      %v165 = vpack.c.bf16 %v152, %v151
      %v166 = vpack.c.bf16 %v154, %v153
      %v167 = vpack.c.bf16 %v156, %v155
      %v168 = vpack.c.bf16 %v158, %v157
      %v169 = vpack.c.bf16 %v160, %v159
      %v170 = vpack.c.bf16 %v162, %v161
      %v171 = vld [vmem:[%s1] sm:$0xff]
      %v172 = vld [vmem:[%s1 + $0x8] sm:$0xff]
      %v173 = vld [vmem:[%s1 + $0x10] sm:$0xff]
      %v174 = vld [vmem:[%s1 + $0x18] sm:$0xff]
      %v175 = vld [vmem:[%s1 + $0x20] sm:$0xff]
      %v176 = vld [vmem:[%s1 + $0x28] sm:$0xff]
      %v177 = vld [vmem:[%s1 + $0x30] sm:$0xff]
      %v178 = vld [vmem:[%s1 + $0x38] sm:$0xff]
      %v179 = vld [vmem:[%s1 + $0x40] sm:$0xff]
      %v180 = vld [vmem:[%s1 + $0x48] sm:$0xff]
      %v181 = vld [vmem:[%s1 + $0x50] sm:$0xff]
      %v182 = vld [vmem:[%s1 + $0x58] sm:$0xff]
      %v183 = vld [vmem:[%s1 + $0x60] sm:$0xff]
      %v184 = vld [vmem:[%s1 + $0x68] sm:$0xff]
      %v185 = vld [vmem:[%s1 + $0x70] sm:$0xff]
      %v186 = vld [vmem:[%s1 + $0x78] sm:$0xff]
      %v187 = vpack.c.bf16 %v172, %v171
      %v188 = vpack.c.bf16 %v174, %v173
      %v189 = vpack.c.bf16 %v176, %v175
      %v190 = vpack.c.bf16 %v178, %v177
      %v191 = vpack.c.bf16 %v180, %v179
      %v192 = vpack.c.bf16 %v182, %v181
      %v193 = vpack.c.bf16 %v184, %v183
      %v194 = vpack.c.bf16 %v186, %v185
      %195 = vmatpush.bf16.msra.mxu0 %v194
      %196 = vmatpush.bf16.msra.mxu0 %v193
      %197 = vmatpush.bf16.msra.mxu0 %v192
      %198 = vmatpush.bf16.msra.mxu0 %v191
      %199 = vmatpush.bf16.msra.mxu0 %v190
      %200 = vmatpush.bf16.msra.mxu0 %v189
      %201 = vmatpush.bf16.msra.mxu0 %v188
      %202 = vmatpush.bf16.msra.mxu0 %v187
      %203 = vmatmul.bf16.gmra.mxu0 %v163
      %v204 = vpop.f32.mrf.mxu0
      %v205 = vadd.f32 0.0, %v204
      %v206 = vpop.f32.mrf.mxu0
      %v207 = vadd.f32 0.0, %v206
      %208 = vmatmul.bf16.gmra.mxu0 %v164
      %v209 = vpop.f32.mrf.mxu0
      %v210 = vadd.f32 0.0, %v209
      %v211 = vpop.f32.mrf.mxu0
      %v212 = vadd.f32 0.0, %v211
      %213 = vmatmul.bf16.gmra.mxu0 %v165
      %v214 = vpop.f32.mrf.mxu0
      %v215 = vadd.f32 0.0, %v214
      %v216 = vpop.f32.mrf.mxu0
      %v217 = vadd.f32 0.0, %v216
      %218 = vmatmul.bf16.gmra.mxu0 %v166
      %v219 = vpop.f32.mrf.mxu0
      %v220 = vadd.f32 0.0, %v219
      %v221 = vpop.f32.mrf.mxu0
      %v222 = vadd.f32 0.0, %v221
      %223 = vmatmul.bf16.gmra.mxu0 %v167
      %v224 = vpop.f32.mrf.mxu0
      %v225 = vadd.f32 0.0, %v224
      %v226 = vpop.f32.mrf.mxu0
      %v227 = vadd.f32 0.0, %v226
      %228 = vmatmul.bf16.gmra.mxu0 %v168
      %v229 = vpop.f32.mrf.mxu0
      %v230 = vadd.f32 0.0, %v229
      %v231 = vpop.f32.mrf.mxu0
      %v232 = vadd.f32 0.0, %v231
      %233 = vmatmul.bf16.gmra.mxu0 %v169
      %v234 = vpop.f32.mrf.mxu0
      %v235 = vadd.f32 0.0, %v234
      %v236 = vpop.f32.mrf.mxu0
      %v237 = vadd.f32 0.0, %v236
      %238 = vmatmul.bf16.gmra.mxu0 %v170
      %v239 = vpop.f32.mrf.mxu0
      %v240 = vadd.f32 0.0, %v239
      %v241 = vpop.f32.mrf.mxu0
      %v242 = vadd.f32 0.0, %v241
      %243 = vdwg.mxu0
      %v244 = vpack.c.bf16 %v205, %v205
      %v245 = vpack.c.bf16 %v207, %v207
      %v246 = vpack.c.bf16 %v210, %v210
      %v247 = vpack.c.bf16 %v212, %v212
      %v248 = vpack.c.bf16 %v215, %v215
      %v249 = vpack.c.bf16 %v217, %v217
      %v250 = vpack.c.bf16 %v220, %v220
      %v251 = vpack.c.bf16 %v222, %v222
      %v252 = vpack.c.bf16 %v225, %v225
      %v253 = vpack.c.bf16 %v227, %v227
      %v254 = vpack.c.bf16 %v230, %v230
      %v255 = vpack.c.bf16 %v232, %v232
      %v256 = vpack.c.bf16 %v235, %v235
      %v257 = vpack.c.bf16 %v237, %v237
      %v258 = vpack.c.bf16 %v240, %v240
      %v259 = vpack.c.bf16 %v242, %v242
      %260 = vst [vmem:[%s145] sm:$0xf] %v244
      %261 = vst [vmem:[%s145 + $0x4] sm:$0xf] %v245
      %262 = vst [vmem:[%s145 + $0x8] sm:$0xf] %v246
      %263 = vst [vmem:[%s145 + $0xc] sm:$0xf] %v247
      %264 = vst [vmem:[%s145 + $0x10] sm:$0xf] %v248
      %265 = vst [vmem:[%s145 + $0x14] sm:$0xf] %v249
      %266 = vst [vmem:[%s145 + $0x18] sm:$0xf] %v250
      %267 = vst [vmem:[%s145 + $0x1c] sm:$0xf] %v251
      %268 = vst [vmem:[%s145 + $0x20] sm:$0xf] %v252
      %269 = vst [vmem:[%s145 + $0x24] sm:$0xf] %v253
      %270 = vst [vmem:[%s145 + $0x28] sm:$0xf] %v254
      %271 = vst [vmem:[%s145 + $0x2c] sm:$0xf] %v255
      %272 = vst [vmem:[%s145 + $0x30] sm:$0xf] %v256
      %273 = vst [vmem:[%s145 + $0x34] sm:$0xf] %v257
      %274 = vst [vmem:[%s145 + $0x38] sm:$0xf] %v258
      %275 = vst [vmem:[%s145 + $0x3c] sm:$0xf] %v259
      %s276 = smul.u32 16, %s13
      %p277 = scmp.lt.s32.totalorder %s276, 31
      %s278 = scalar_select %p277, %s276, 31
      %s279 = smul.addr %s278, 4
      %s280 = scalar_lea.vmem %s2, %s279
      // Predicated region
      $region29: #{gcn_forward.3} parent=27 // pred_check
        %p281 = pneg %p78
      $region30: #{gcn_forward.3} parent=27 // pred_check_branch
        %283 = sbr.rel (%p281) target = $region32
      $region31: #{gcn_forward.3} parent=27 // pred_region
        %s284 = smul.u32 16, %s13
      $region32: #{gcn_forward.3} parent=27 // pred_fallthru
        _
    $region28: #{gcn_forward.3} parent=5 // pred_fallthru
      _
    %p285 = scmp.le.s32.totalorder 2, %s8
    // Predicated region
    $region33: #{gcn_forward.3} parent=5 // pred_check
      %p286 = pneg %p285
    $region34: #{gcn_forward.3} parent=5 // pred_check_branch
      %288 = sbr.rel (%p286) target = $region36
    $region35: #{gcn_forward.3} parent=5 // pred_region
      %s289 = ssub.s32 %s8, 2
      // Predicated region
      $region37: #{gcn_forward.3} parent=35 // pred_check
        %p290 = pneg %p84
      $region38: #{gcn_forward.3} parent=35 // pred_check_branch
        %292 = sbr.rel (%p290) target = $region40
      $region39: #{gcn_forward.3} parent=35 // pred_region
        %s293 = smul.u32 16, %s14
        %p294 = scmp.lt.s32.totalorder %s293, 31
        %s295 = scalar_select %p294, %s293, 31
        %s296 = smul.addr %s295, 4
        %s297 = scalar_lea.vmem %s2, %s296
      $region40: #{gcn_forward.3} parent=35 // pred_fallthru
        _
    $region36: #{gcn_forward.3} parent=5 // pred_fallthru
      _
  $region6: #{gcn_forward.3} parent=0 // loop_footer
    %s12 = sadd.s32 1, %s8
  $region7: #{gcn_forward.3} parent=0 // loop_footer_branch
    %7 = sbr.rel target = $region3
  $region8: #{gcn_forward.3} parent=0 // loop_exit
    _

// kernel: gcn_forward.5
$region0: #{gcn_forward.5}
  #allocation0 [shape = 'u32[]', space=smem, size = 0x4, offset = 0x4, fixed_abs, tag = 'smem constant byte address 0x4 - core index']
  #allocation1 [shape = 'u32[72,128]{1,0:T(1,128)}', space=vmem, size = 0x9000, scoped, tag = 'internal scratch']
  #allocation2 [shape = 'f32[128,128]{1,0:T(8,128)}', space=vmem, size = 0x10000, scoped, tag = 'scratch operand']
  %s0 = inlined_call_operand.vmem [shape: bf16[256,256], index: 0, kind: input, shape index: {}]
  %s1 = inlined_call_operand.vmem [shape: bf16[256,128], index: 1, kind: input, shape index: {}]
  %s2 = inlined_call_operand.vmem [shape: f32[1,128], index: 2, kind: input, shape index: {}]
  %s3 = inlined_call_operand.vmem [shape: f32[256,128], index: 3, kind: output, shape index: {}]
  %s4 = sld [smem:[#allocation0]]
  $region53: #{gcn_forward.5} parent=0
    _
  %s6 = ssub.s32 1, %s4
  %s7 = scalar_select 0, %s6, %s4
  loop: start=0, step=1, limit=4
  $region2: #{gcn_forward.5} parent=0 // loop_pre_header
    _
  $region3: #{gcn_forward.5} parent=0 // loop_header
    %s9 = sphi 0, %s13
    %p10 = scmp.ge.s32.totalorder %s9, 4
    %s16 = sphi 0, %s28
    %s17 = sphi 0, %s24
    %s18 = sphi 0, %s16
    %s19 = sphi 0, %s17
    %s20 = sphi 0, %s18
    %s21 = sphi 0, %s19
    %s33 = sphi 0, %s35
    %s36 = sphi 0, %s33
    %s37 = sphi 0, %s36
    %s53 = sphi 0, %s37
    %s59 = sphi 0, %s61
    %s62 = sphi 0, %s59
    %s63 = sphi 0, %s62
    %s79 = sphi 0, %s63
    %s83 = sphi 0, %s83
    %s85 = sphi 0, %s83
    %s86 = sphi 0, %s85
    %s100 = sphi 0, %s86
    %s106 = sphi 0, %s108
    %s109 = sphi 0, %s106
    %s110 = sphi 0, %s109
    %s126 = sphi 0, %s110
  $region4: #{gcn_forward.5} parent=0 // loop_header_branch
    %12 = sbr.rel (%p10) target = $region8
  $region5: #{gcn_forward.5} parent=0 // loop_body
    %s14 = ssub.s32 %s9, 1
    %s15 = ssub.s32 %s9, 2
    %s22 = sadd.s32 1, %s17
    %p23 = scmp.ge.s32.totalorder %s22, 1
    %s24 = scalar_select %p23, 0, %s22
    %s25 = sadd.s32 1, %s16
    %s26 = scalar_select %p23, %s25, %s16
    %p27 = scmp.ge.s32.totalorder %s26, 2
    %s28 = scalar_select %p27, 0, %s26
    %s29 = ssub.s32 %s16, %s28
    %s30 = ssub.s32 %s17, %s24
    %s31 = sor.u32 %s29, %s30
    %p32 = scmp.eq.s32.totalorder %s31, 0
    %s34 = sadd.s32 %s33, 1
    %s35 = scalar_select %p32, %s33, %s34
    %p38 = pneg %p32
    %p39 = scmp.eq.s32.totalorder %s9, 1
    %p40 = por %p38, %p39
    %p41 = scmp.ne.s32.totalorder %s33, %s36
    %p42 = scmp.eq.s32.totalorder %s9, 0
    %p43 = por %p41, %p42
    %p44 = scmp.ne.s32.totalorder %s33, %s36
    %p45 = scmp.eq.s32.totalorder %s14, 1
    %p46 = por %p44, %p45
    %p47 = scmp.ne.s32.totalorder %s36, %s37
    %p48 = scmp.eq.s32.totalorder %s14, 0
    %p49 = por %p47, %p48
    %p50 = scmp.ne.s32.totalorder %s36, %s37
    %p51 = scmp.eq.s32.totalorder %s15, 1
    %p52 = por %p50, %p51
    %p54 = scmp.ne.s32.totalorder %s37, %s53
    %p55 = scmp.eq.s32.totalorder %s15, 0
    %p56 = por %p54, %p55
    %s57 = ssub.s32 %s17, %s24
    %p58 = scmp.eq.s32.totalorder %s57, 0
    %s60 = sadd.s32 %s59, 1
    %s61 = scalar_select %p58, %s59, %s60
    %p64 = pneg %p58
    %p65 = scmp.eq.s32.totalorder %s9, 1
    %p66 = por %p64, %p65
    %p67 = scmp.ne.s32.totalorder %s59, %s62
    %p68 = scmp.eq.s32.totalorder %s9, 0
    %p69 = por %p67, %p68
    %p70 = scmp.ne.s32.totalorder %s59, %s62
    %p71 = scmp.eq.s32.totalorder %s14, 1
    %p72 = por %p70, %p71
    %p73 = scmp.ne.s32.totalorder %s62, %s63
    %p74 = scmp.eq.s32.totalorder %s14, 0
    %p75 = por %p73, %p74
    %p76 = scmp.ne.s32.totalorder %s62, %s63
    %p77 = scmp.eq.s32.totalorder %s15, 1
    %p78 = por %p76, %p77
    %p80 = scmp.ne.s32.totalorder %s63, %s79
    %p81 = scmp.eq.s32.totalorder %s15, 0
    %p82 = por %p80, %p81
    %s84 = sadd.s32 %s83, 1
    %p87 = scmp.eq.s32.totalorder %s9, 1
    %p88 = scmp.ne.s32.totalorder %s83, %s85
    %p89 = scmp.eq.s32.totalorder %s9, 0
    %p90 = por %p88, %p89
    %p91 = scmp.ne.s32.totalorder %s83, %s85
    %p92 = scmp.eq.s32.totalorder %s14, 1
    %p93 = por %p91, %p92
    %p94 = scmp.ne.s32.totalorder %s85, %s86
    %p95 = scmp.eq.s32.totalorder %s14, 0
    %p96 = por %p94, %p95
    %p97 = scmp.ne.s32.totalorder %s85, %s86
    %p98 = scmp.eq.s32.totalorder %s15, 1
    %p99 = por %p97, %p98
    %p101 = scmp.ne.s32.totalorder %s86, %s100
    %p102 = scmp.eq.s32.totalorder %s15, 0
    %p103 = por %p101, %p102
    %s104 = ssub.s32 %s16, %s28
    %p105 = scmp.eq.s32.totalorder %s104, 0
    %s107 = sadd.s32 %s106, 1
    %s108 = scalar_select %p105, %s106, %s107
    %p111 = pneg %p105
    %p112 = scmp.eq.s32.totalorder %s9, 1
    %p113 = por %p111, %p112
    %p114 = scmp.ne.s32.totalorder %s106, %s109
    %p115 = scmp.eq.s32.totalorder %s9, 0
    %p116 = por %p114, %p115
    %p117 = scmp.ne.s32.totalorder %s106, %s109
    %p118 = scmp.eq.s32.totalorder %s14, 1
    %p119 = por %p117, %p118
    %p120 = scmp.ne.s32.totalorder %s109, %s110
    %p121 = scmp.eq.s32.totalorder %s14, 0
    %p122 = por %p120, %p121
    %p123 = scmp.ne.s32.totalorder %s109, %s110
    %p124 = scmp.eq.s32.totalorder %s15, 1
    %p125 = por %p123, %p124
    %p127 = scmp.ne.s32.totalorder %s110, %s126
    %p128 = scmp.eq.s32.totalorder %s15, 0
    %p129 = por %p127, %p128
    %p130 = scmp.le.s32.totalorder 1, %s9
    %p131 = scmp.lt.s32.totalorder %s9, 3
    %p132 = pnand %p130, %p131
    %p133 = pneg %p132
    // Predicated region
    $region9: #{gcn_forward.5} parent=5 // pred_check
      _
    $region10: #{gcn_forward.5} parent=5 // pred_check_branch
      %135 = sbr.rel (%p132) target = $region12
    $region11: #{gcn_forward.5} parent=5 // pred_region
      %s136 = ssub.s32 %s9, 1
      // Predicated region
      $region13: #{gcn_forward.5} parent=11 // pred_check
        %p137 = pneg %p75
      $region14: #{gcn_forward.5} parent=11 // pred_check_branch
        %139 = sbr.rel (%p137) target = $region16
      $region15: #{gcn_forward.5} parent=11 // pred_region
        %s140 = smul.u32 32, %s19
        %p141 = scmp.lt.s32.totalorder %s140, 31
        %s142 = scalar_select %p141, %s140, 31
        %s143 = smul.addr %s142, 4
        %s144 = scalar_lea.vmem %s1, %s143
        %s145 = smul.u32 32, %s19
      $region16: #{gcn_forward.5} parent=11 // pred_fallthru
        _
      // Predicated region
      $region17: #{gcn_forward.5} parent=11 // pred_check
        %p146 = pneg %p96
      $region18: #{gcn_forward.5} parent=11 // pred_check_branch
        %148 = sbr.rel (%p146) target = $region20
      $region19: #{gcn_forward.5} parent=11 // pred_region
        _
      $region20: #{gcn_forward.5} parent=11 // pred_fallthru
        _
    $region12: #{gcn_forward.5} parent=5 // pred_fallthru
      _
    %p149 = scmp.lt.s32.totalorder %s9, 2
    // Predicated region
    $region21: #{gcn_forward.5} parent=5 // pred_check
      %p150 = pneg %p149
    $region22: #{gcn_forward.5} parent=5 // pred_check_branch
      %152 = sbr.rel (%p150) target = $region24
    $region23: #{gcn_forward.5} parent=5 // pred_region
      // Predicated region
      $region25: #{gcn_forward.5} parent=23 // pred_check
        %p153 = pneg %p43
      $region26: #{gcn_forward.5} parent=23 // pred_check_branch
        %155 = sbr.rel (%p153) target = $region28
      $region27: #{gcn_forward.5} parent=23 // pred_region
        %s156 = smul.u32 16, %s16
        %s157 = smul.u32 2, %s17
        %p158 = scmp.lt.s32.totalorder %s156, 31
        %s159 = scalar_select %p158, %s156, 31
        %p160 = scmp.lt.s32.totalorder %s157, 1
        %s161 = scalar_select %p160, %s157, 1
        %s162 = smul.addr %s159, 2
        %s163 = sadd.s32 %s161, %s162
        %s164 = smul.addr %s163, 4
        %s165 = scalar_lea.vmem %s0, %s164
        %s166 = smul.u32 16, %s16
        %s167 = smul.u32 2, %s17
      $region28: #{gcn_forward.5} parent=23 // pred_fallthru
        _
    $region24: #{gcn_forward.5} parent=5 // pred_fallthru
      _
    %p168 = scmp.le.s32.totalorder 1, %s9
    %p169 = scmp.lt.s32.totalorder %s9, 3
    %p170 = pnand %p168, %p169
    %p171 = pneg %p170
    // Predicated region
    $region29: #{gcn_forward.5} parent=5 // pred_check
      _
    $region30: #{gcn_forward.5} parent=5 // pred_check_branch
      %173 = sbr.rel (%p170) target = $region32
    $region31: #{gcn_forward.5} parent=5 // pred_region
      %s174 = ssub.s32 %s9, 1
      %s175 = smul.u32 16, %s18
      %s176 = smul.u32 2, %s19
      %p177 = scmp.lt.s32.totalorder %s175, 31
      %s178 = scalar_select %p177, %s175, 31
      %p179 = scmp.lt.s32.totalorder %s176, 1
      %s180 = scalar_select %p179, %s176, 1
      %s181 = smul.addr %s178, 2
      %s182 = sadd.s32 %s180, %s181
      %s183 = smul.addr %s182, 4
      %s184 = scalar_lea.vmem %s0, %s183
      %p185 = pneg %p49
      %p186 = pneg %p46
      %s187 = smul.u32 32, %s19
      %p188 = scmp.lt.s32.totalorder %s187, 31
      %s189 = scalar_select %p188, %s187, 31
      %s190 = smul.addr %s189, 4
      %s191 = scalar_lea.vmem %s1, %s190
      %p192 = pneg %p75
      %p193 = pneg %p72
      %p194 = pneg %p96
      %p195 = pneg %p93
      %p196 = pneg %p122
      %p197 = pneg %p119
      %s198 = smul.u32 16, %s18
      %p199 = scmp.lt.s32.totalorder %s198, 31
      %s200 = scalar_select %p199, %s198, 31
      %s201 = smul.addr %s200, 8
      %s202 = scalar_lea.vmem %s3, %s201
      %s203 = smul.u32 16, %s18
      %s204 = smul.u32 2, %s19
      %p205 = scmp.lt.s32.totalorder %s203, 31
      %s206 = scalar_select %p205, %s203, 31
      %p207 = scmp.lt.s32.totalorder %s204, 1
      %s208 = scalar_select %p207, %s204, 1
      %s209 = smul.addr %s206, 2
      %s210 = sadd.s32 %s208, %s209
      %s211 = smul.addr %s210, 4
      %s212 = scalar_lea.vmem %s0, %s211
      %s213 = smul.u32 16, %s18
      %s214 = smul.u32 2, %s19
      %s215 = smul.u32 32, %s19
      %p216 = scmp.lt.s32.totalorder %s215, 31
      %s217 = scalar_select %p216, %s215, 31
      %s218 = smul.addr %s217, 4
      %s219 = scalar_lea.vmem %s1, %s218
      %s220 = smul.u32 32, %s19
      %s221 = smul.u32 16, %s18
      %p222 = scmp.lt.s32.totalorder %s221, 31
      %s223 = scalar_select %p222, %s221, 31
      %s224 = smul.addr %s223, 8
      %s225 = scalar_lea.vmem %s3, %s224
      %s226 = smul.u32 16, %s18
      %p227 = scmp.eq.s32.totalorder %s19, 0
      // Predicated region
      $region33: #{gcn_forward.5} parent=31 // pred_check
        %p228 = pneg %p227
      $region34: #{gcn_forward.5} parent=31 // pred_check_branch
        %230 = sbr.rel (%p228) target = $region36
      $region35: #{gcn_forward.5} parent=31 // pred_region
        %231 = vst [vmem:[#allocation2] sm:$0xff] 0.0
        %232 = vst [vmem:[#allocation2 + $0x8] sm:$0xff] 0.0
        %233 = vst [vmem:[#allocation2 + $0x10] sm:$0xff] 0.0
        %234 = vst [vmem:[#allocation2 + $0x18] sm:$0xff] 0.0
        %235 = vst [vmem:[#allocation2 + $0x20] sm:$0xff] 0.0
        %236 = vst [vmem:[#allocation2 + $0x28] sm:$0xff] 0.0
        %237 = vst [vmem:[#allocation2 + $0x30] sm:$0xff] 0.0
        %238 = vst [vmem:[#allocation2 + $0x38] sm:$0xff] 0.0
        %239 = vst [vmem:[#allocation2 + $0x40] sm:$0xff] 0.0
        %240 = vst [vmem:[#allocation2 + $0x48] sm:$0xff] 0.0
        %241 = vst [vmem:[#allocation2 + $0x50] sm:$0xff] 0.0
        %242 = vst [vmem:[#allocation2 + $0x58] sm:$0xff] 0.0
        %243 = vst [vmem:[#allocation2 + $0x60] sm:$0xff] 0.0
        %244 = vst [vmem:[#allocation2 + $0x68] sm:$0xff] 0.0
        %245 = vst [vmem:[#allocation2 + $0x70] sm:$0xff] 0.0
        %246 = vst [vmem:[#allocation2 + $0x78] sm:$0xff] 0.0
      $region36: #{gcn_forward.5} parent=31 // pred_fallthru
        _
      %v247 = vld [vmem:[#allocation2] sm:$0xff]
      %v248 = vld [vmem:[#allocation2 + $0x8] sm:$0xff]
      %v249 = vld [vmem:[#allocation2 + $0x10] sm:$0xff]
      %v250 = vld [vmem:[#allocation2 + $0x18] sm:$0xff]
      %v251 = vld [vmem:[#allocation2 + $0x20] sm:$0xff]
      %v252 = vld [vmem:[#allocation2 + $0x28] sm:$0xff]
      %v253 = vld [vmem:[#allocation2 + $0x30] sm:$0xff]
      %v254 = vld [vmem:[#allocation2 + $0x38] sm:$0xff]
      %v255 = vld [vmem:[#allocation2 + $0x40] sm:$0xff]
      %v256 = vld [vmem:[#allocation2 + $0x48] sm:$0xff]
      %v257 = vld [vmem:[#allocation2 + $0x50] sm:$0xff]
      %v258 = vld [vmem:[#allocation2 + $0x58] sm:$0xff]
      %v259 = vld [vmem:[#allocation2 + $0x60] sm:$0xff]
      %v260 = vld [vmem:[#allocation2 + $0x68] sm:$0xff]
      %v261 = vld [vmem:[#allocation2 + $0x70] sm:$0xff]
      %v262 = vld [vmem:[#allocation2 + $0x78] sm:$0xff]
      %v263 = vld [vmem:[%s212] sm:$0xff]
      %v264 = vld [vmem:[%s212 + $0x8] sm:$0xff]
      %v265 = vld [vmem:[%s212 + $0x10] sm:$0xff]
      %v266 = vld [vmem:[%s212 + $0x18] sm:$0xff]
      %v267 = vld [vmem:[%s212 + $0x20] sm:$0xff]
      %v268 = vld [vmem:[%s212 + $0x28] sm:$0xff]
      %v269 = vld [vmem:[%s212 + $0x30] sm:$0xff]
      %v270 = vld [vmem:[%s212 + $0x38] sm:$0xff]
      %v271 = vld [vmem:[%s212 + $0x40] sm:$0xff]
      %v272 = vld [vmem:[%s212 + $0x48] sm:$0xff]
      %v273 = vld [vmem:[%s212 + $0x50] sm:$0xff]
      %v274 = vld [vmem:[%s212 + $0x58] sm:$0xff]
      %v275 = vld [vmem:[%s212 + $0x60] sm:$0xff]
      %v276 = vld [vmem:[%s212 + $0x68] sm:$0xff]
      %v277 = vld [vmem:[%s212 + $0x70] sm:$0xff]
      %v278 = vld [vmem:[%s212 + $0x78] sm:$0xff]
      %v279 = vld [vmem:[%s219] sm:$0xf]
      %v280 = vld [vmem:[%s219 + $0x4] sm:$0xf]
      %v281 = vld [vmem:[%s219 + $0x8] sm:$0xf]
      %v282 = vld [vmem:[%s219 + $0xc] sm:$0xf]
      %v283 = vld [vmem:[%s219 + $0x10] sm:$0xf]
      %v284 = vld [vmem:[%s219 + $0x14] sm:$0xf]
      %v285 = vld [vmem:[%s219 + $0x18] sm:$0xf]
      %v286 = vld [vmem:[%s219 + $0x1c] sm:$0xf]
      %v287 = vld [vmem:[%s219 + $0x20] sm:$0xf]
      %v288 = vld [vmem:[%s219 + $0x24] sm:$0xf]
      %v289 = vld [vmem:[%s219 + $0x28] sm:$0xf]
      %v290 = vld [vmem:[%s219 + $0x2c] sm:$0xf]
      %v291 = vld [vmem:[%s219 + $0x30] sm:$0xf]
      %v292 = vld [vmem:[%s219 + $0x34] sm:$0xf]
      %v293 = vld [vmem:[%s219 + $0x38] sm:$0xf]
      %v294 = vld [vmem:[%s219 + $0x3c] sm:$0xf]
      %v295 = vld [vmem:[%s219 + $0x40] sm:$0xf]
      %v296 = vld [vmem:[%s219 + $0x44] sm:$0xf]
      %v297 = vld [vmem:[%s219 + $0x48] sm:$0xf]
      %v298 = vld [vmem:[%s219 + $0x4c] sm:$0xf]
      %v299 = vld [vmem:[%s219 + $0x50] sm:$0xf]
      %v300 = vld [vmem:[%s219 + $0x54] sm:$0xf]
      %v301 = vld [vmem:[%s219 + $0x58] sm:$0xf]
      %v302 = vld [vmem:[%s219 + $0x5c] sm:$0xf]
      %v303 = vld [vmem:[%s219 + $0x60] sm:$0xf]
      %v304 = vld [vmem:[%s219 + $0x64] sm:$0xf]
      %v305 = vld [vmem:[%s219 + $0x68] sm:$0xf]
      %v306 = vld [vmem:[%s219 + $0x6c] sm:$0xf]
      %v307 = vld [vmem:[%s219 + $0x70] sm:$0xf]
      %v308 = vld [vmem:[%s219 + $0x74] sm:$0xf]
      %v309 = vld [vmem:[%s219 + $0x78] sm:$0xf]
      %v310 = vld [vmem:[%s219 + $0x7c] sm:$0xf]
      %v327 = vunpack.c.l.b16 %v263
      %v328 = vunpack.c.h.b16 %v263
      %v329 = vunpack.c.l.b16 %v264
      %v330 = vunpack.c.h.b16 %v264
      %v331 = vunpack.c.l.b16 %v265
      %v332 = vunpack.c.h.b16 %v265
      %v333 = vunpack.c.l.b16 %v266
      %v334 = vunpack.c.h.b16 %v266
      %v335 = vunpack.c.l.b16 %v267
      %v336 = vunpack.c.h.b16 %v267
      %v337 = vunpack.c.l.b16 %v268
      %v338 = vunpack.c.h.b16 %v268
      %v339 = vunpack.c.l.b16 %v269
      %v340 = vunpack.c.h.b16 %v269
      %v341 = vunpack.c.l.b16 %v270
      %v342 = vunpack.c.h.b16 %v270
      %v343 = vunpack.c.l.b16 %v271
      %v344 = vunpack.c.h.b16 %v271
      %v345 = vunpack.c.l.b16 %v272
      %v346 = vunpack.c.h.b16 %v272
      %v347 = vunpack.c.l.b16 %v273
      %v348 = vunpack.c.h.b16 %v273
      %v349 = vunpack.c.l.b16 %v274
      %v350 = vunpack.c.h.b16 %v274
      %v351 = vunpack.c.l.b16 %v275
      %v352 = vunpack.c.h.b16 %v275
      %v353 = vunpack.c.l.b16 %v276
      %v354 = vunpack.c.h.b16 %v276
      %v355 = vunpack.c.l.b16 %v277
      %v356 = vunpack.c.h.b16 %v277
      %v357 = vunpack.c.l.b16 %v278
      %v358 = vunpack.c.h.b16 %v278
      %v359 = vpack.c.b16 %v329, %v327
      %v360 = vpack.c.b16 %v330, %v328
      %v361 = vpack.c.b16 %v333, %v331
      %v362 = vpack.c.b16 %v334, %v332
      %v363 = vpack.c.b16 %v337, %v335
      %v364 = vpack.c.b16 %v338, %v336
      %v365 = vpack.c.b16 %v341, %v339
      %v366 = vpack.c.b16 %v342, %v340
      %v367 = vpack.c.b16 %v345, %v343
      %v368 = vpack.c.b16 %v346, %v344
      %v369 = vpack.c.b16 %v349, %v347
      %v370 = vpack.c.b16 %v350, %v348
      %v371 = vpack.c.b16 %v353, %v351
      %v372 = vpack.c.b16 %v354, %v352
      %v373 = vpack.c.b16 %v357, %v355
      %v374 = vpack.c.b16 %v358, %v356
      %v423 = vunpack.c.l.b16 %v279
      %v424 = vunpack.c.l.b16 %v280
      %v425 = vunpack.c.l.b16 %v281
      %v426 = vunpack.c.l.b16 %v282
      %v427 = vunpack.c.l.b16 %v283
      %v428 = vunpack.c.l.b16 %v284
      %v429 = vunpack.c.l.b16 %v285
      %v430 = vunpack.c.l.b16 %v286
      %v431 = vunpack.c.l.b16 %v287
      %v432 = vunpack.c.l.b16 %v288
      %v433 = vunpack.c.l.b16 %v289
      %v434 = vunpack.c.l.b16 %v290
      %v435 = vunpack.c.l.b16 %v291
      %v436 = vunpack.c.l.b16 %v292
      %v437 = vunpack.c.l.b16 %v293
      %v438 = vunpack.c.l.b16 %v294
      %v439 = vunpack.c.l.b16 %v295
      %v440 = vunpack.c.l.b16 %v296
      %v441 = vunpack.c.l.b16 %v297
      %v442 = vunpack.c.l.b16 %v298
      %v443 = vunpack.c.l.b16 %v299
      %v444 = vunpack.c.l.b16 %v300
      %v445 = vunpack.c.l.b16 %v301
      %v446 = vunpack.c.l.b16 %v302
      %v447 = vunpack.c.l.b16 %v303
      %v448 = vunpack.c.l.b16 %v304
      %v449 = vunpack.c.l.b16 %v305
      %v450 = vunpack.c.l.b16 %v306
      %v451 = vunpack.c.l.b16 %v307
      %v452 = vunpack.c.l.b16 %v308
      %v453 = vunpack.c.l.b16 %v309
      %v454 = vunpack.c.l.b16 %v310
      %v455 = vpack.c.b16 %v424, %v423
      %v456 = vpack.c.b16 %v426, %v425
      %v457 = vpack.c.b16 %v428, %v427
      %v458 = vpack.c.b16 %v430, %v429
      %v459 = vpack.c.b16 %v432, %v431
      %v460 = vpack.c.b16 %v434, %v433
      %v461 = vpack.c.b16 %v436, %v435
      %v462 = vpack.c.b16 %v438, %v437
      %v463 = vpack.c.b16 %v440, %v439
      %v464 = vpack.c.b16 %v442, %v441
      %v465 = vpack.c.b16 %v444, %v443
      %v466 = vpack.c.b16 %v446, %v445
      %v467 = vpack.c.b16 %v448, %v447
      %v468 = vpack.c.b16 %v450, %v449
      %v469 = vpack.c.b16 %v452, %v451
      %v470 = vpack.c.b16 %v454, %v453
      %487 = vmatpush.bf16.msra.mxu0 %v462
      %488 = vmatpush.bf16.msra.mxu0 %v461
      %489 = vmatpush.bf16.msra.mxu0 %v460
      %490 = vmatpush.bf16.msra.mxu0 %v459
      %491 = vmatpush.bf16.msra.mxu0 %v458
      %492 = vmatpush.bf16.msra.mxu0 %v457
      %493 = vmatpush.bf16.msra.mxu0 %v456
      %494 = vmatpush.bf16.msra.mxu0 %v455
      %495 = vmatmul.bf16.gmra.mxu0 %v359
      %v496 = vpop.f32.mrf.mxu0
      %v497 = vadd.f32 0.0, %v496
      %v498 = vpop.f32.mrf.mxu0
      %v499 = vadd.f32 0.0, %v498
      %500 = vmatmul.bf16.gmra.mxu0 %v361
      %v501 = vpop.f32.mrf.mxu0
      %v502 = vadd.f32 0.0, %v501
      %v503 = vpop.f32.mrf.mxu0
      %v504 = vadd.f32 0.0, %v503
      %505 = vmatmul.bf16.gmra.mxu0 %v363
      %v506 = vpop.f32.mrf.mxu0
      %v507 = vadd.f32 0.0, %v506
      %v508 = vpop.f32.mrf.mxu0
      %v509 = vadd.f32 0.0, %v508
      %510 = vmatmul.bf16.gmra.mxu0 %v365
      %v511 = vpop.f32.mrf.mxu0
      %v512 = vadd.f32 0.0, %v511
      %v513 = vpop.f32.mrf.mxu0
      %v514 = vadd.f32 0.0, %v513
      %515 = vmatmul.bf16.gmra.mxu0 %v367
      %v516 = vpop.f32.mrf.mxu0
      %v517 = vadd.f32 0.0, %v516
      %v518 = vpop.f32.mrf.mxu0
      %v519 = vadd.f32 0.0, %v518
      %520 = vmatmul.bf16.gmra.mxu0 %v369
      %v521 = vpop.f32.mrf.mxu0
      %v522 = vadd.f32 0.0, %v521
      %v523 = vpop.f32.mrf.mxu0
      %v524 = vadd.f32 0.0, %v523
      %525 = vmatmul.bf16.gmra.mxu0 %v371
      %v526 = vpop.f32.mrf.mxu0
      %v527 = vadd.f32 0.0, %v526
      %v528 = vpop.f32.mrf.mxu0
      %v529 = vadd.f32 0.0, %v528
      %530 = vmatmul.bf16.gmra.mxu0 %v373
      %v531 = vpop.f32.mrf.mxu0
      %v532 = vadd.f32 0.0, %v531
      %v533 = vpop.f32.mrf.mxu0
      %v534 = vadd.f32 0.0, %v533
      %535 = vdwg.mxu0
      %536 = vmatpush.bf16.msra.mxu0 %v470
      %537 = vmatpush.bf16.msra.mxu0 %v469
      %538 = vmatpush.bf16.msra.mxu0 %v468
      %539 = vmatpush.bf16.msra.mxu0 %v467
      %540 = vmatpush.bf16.msra.mxu0 %v466
      %541 = vmatpush.bf16.msra.mxu0 %v465
      %542 = vmatpush.bf16.msra.mxu0 %v464
      %543 = vmatpush.bf16.msra.mxu0 %v463
      %544 = vmatmul.bf16.gmra.mxu0 %v360
      %v545 = vpop.f32.mrf.mxu0
      %v546 = vadd.f32 %v497, %v545
      %v547 = vpop.f32.mrf.mxu0
      %v548 = vadd.f32 %v499, %v547
      %549 = vmatmul.bf16.gmra.mxu0 %v362
      %v550 = vpop.f32.mrf.mxu0
      %v551 = vadd.f32 %v502, %v550
      %v552 = vpop.f32.mrf.mxu0
      %v553 = vadd.f32 %v504, %v552
      %554 = vmatmul.bf16.gmra.mxu0 %v364
      %v555 = vpop.f32.mrf.mxu0
      %v556 = vadd.f32 %v507, %v555
      %v557 = vpop.f32.mrf.mxu0
      %v558 = vadd.f32 %v509, %v557
      %559 = vmatmul.bf16.gmra.mxu0 %v366
      %v560 = vpop.f32.mrf.mxu0
      %v561 = vadd.f32 %v512, %v560
      %v562 = vpop.f32.mrf.mxu0
      %v563 = vadd.f32 %v514, %v562
      %564 = vmatmul.bf16.gmra.mxu0 %v368
      %v565 = vpop.f32.mrf.mxu0
      %v566 = vadd.f32 %v517, %v565
      %v567 = vpop.f32.mrf.mxu0
      %v568 = vadd.f32 %v519, %v567
      %569 = vmatmul.bf16.gmra.mxu0 %v370
      %v570 = vpop.f32.mrf.mxu0
      %v571 = vadd.f32 %v522, %v570
      %v572 = vpop.f32.mrf.mxu0
      %v573 = vadd.f32 %v524, %v572
      %574 = vmatmul.bf16.gmra.mxu0 %v372
      %v575 = vpop.f32.mrf.mxu0
      %v576 = vadd.f32 %v527, %v575
      %v577 = vpop.f32.mrf.mxu0
      %v578 = vadd.f32 %v529, %v577
      %579 = vmatmul.bf16.gmra.mxu0 %v374
      %v580 = vpop.f32.mrf.mxu0
      %v581 = vadd.f32 %v532, %v580
      %v582 = vpop.f32.mrf.mxu0
      %v583 = vadd.f32 %v534, %v582
      %584 = vdwg.mxu0
      %v585 = vadd.f32 %v247, %v546
      %v586 = vadd.f32 %v248, %v548
      %v587 = vadd.f32 %v249, %v551
      %v588 = vadd.f32 %v250, %v553
      %v589 = vadd.f32 %v251, %v556
      %v590 = vadd.f32 %v252, %v558
      %v591 = vadd.f32 %v253, %v561
      %v592 = vadd.f32 %v254, %v563
      %v593 = vadd.f32 %v255, %v566
      %v594 = vadd.f32 %v256, %v568
      %v595 = vadd.f32 %v257, %v571
      %v596 = vadd.f32 %v258, %v573
      %v597 = vadd.f32 %v259, %v576
      %v598 = vadd.f32 %v260, %v578
      %v599 = vadd.f32 %v261, %v581
      %v600 = vadd.f32 %v262, %v583
      %601 = vst [vmem:[#allocation2] sm:$0xff] %v585
      %602 = vst [vmem:[#allocation2 + $0x8] sm:$0xff] %v586
      %603 = vst [vmem:[#allocation2 + $0x10] sm:$0xff] %v587
      %604 = vst [vmem:[#allocation2 + $0x18] sm:$0xff] %v588
      %605 = vst [vmem:[#allocation2 + $0x20] sm:$0xff] %v589
      %606 = vst [vmem:[#allocation2 + $0x28] sm:$0xff] %v590
      %607 = vst [vmem:[#allocation2 + $0x30] sm:$0xff] %v591
      %608 = vst [vmem:[#allocation2 + $0x38] sm:$0xff] %v592
      %609 = vst [vmem:[#allocation2 + $0x40] sm:$0xff] %v593
      %610 = vst [vmem:[#allocation2 + $0x48] sm:$0xff] %v594
      %611 = vst [vmem:[#allocation2 + $0x50] sm:$0xff] %v595
      %612 = vst [vmem:[#allocation2 + $0x58] sm:$0xff] %v596
      %613 = vst [vmem:[#allocation2 + $0x60] sm:$0xff] %v597
      %614 = vst [vmem:[#allocation2 + $0x68] sm:$0xff] %v598
      %615 = vst [vmem:[#allocation2 + $0x70] sm:$0xff] %v599
      %616 = vst [vmem:[#allocation2 + $0x78] sm:$0xff] %v600
      // Predicated region
      $region37: #{gcn_forward.5} parent=31 // pred_check
        %p617 = pneg %p227
      $region38: #{gcn_forward.5} parent=31 // pred_check_branch
        %619 = sbr.rel (%p617) target = $region40
      $region39: #{gcn_forward.5} parent=31 // pred_region
        %v620 = vld [vmem:[#allocation2] sm:$0xff]
        %v621 = vld [vmem:[#allocation2 + $0x8] sm:$0xff]
        %v622 = vld [vmem:[#allocation2 + $0x10] sm:$0xff]
        %v623 = vld [vmem:[#allocation2 + $0x18] sm:$0xff]
        %v624 = vld [vmem:[#allocation2 + $0x20] sm:$0xff]
        %v625 = vld [vmem:[#allocation2 + $0x28] sm:$0xff]
        %v626 = vld [vmem:[#allocation2 + $0x30] sm:$0xff]
        %v627 = vld [vmem:[#allocation2 + $0x38] sm:$0xff]
        %v628 = vld [vmem:[#allocation2 + $0x40] sm:$0xff]
        %v629 = vld [vmem:[#allocation2 + $0x48] sm:$0xff]
        %v630 = vld [vmem:[#allocation2 + $0x50] sm:$0xff]
        %v631 = vld [vmem:[#allocation2 + $0x58] sm:$0xff]
        %v632 = vld [vmem:[#allocation2 + $0x60] sm:$0xff]
        %v633 = vld [vmem:[#allocation2 + $0x68] sm:$0xff]
        %v634 = vld [vmem:[#allocation2 + $0x70] sm:$0xff]
        %v635 = vld [vmem:[#allocation2 + $0x78] sm:$0xff]
        %v636 = vld [vmem:[%s2] sm:$0x1]
        %v638 = vperm.slane %v636, 0
        %v640 = vadd.f32 %v620, %v638
        %v641 = vadd.f32 %v621, %v638
        %v642 = vadd.f32 %v622, %v638
        %v643 = vadd.f32 %v623, %v638
        %v644 = vadd.f32 %v624, %v638
        %v645 = vadd.f32 %v625, %v638
        %v646 = vadd.f32 %v626, %v638
        %v647 = vadd.f32 %v627, %v638
        %v648 = vadd.f32 %v628, %v638
        %v649 = vadd.f32 %v629, %v638
        %v650 = vadd.f32 %v630, %v638
        %v651 = vadd.f32 %v631, %v638
        %v652 = vadd.f32 %v632, %v638
        %v653 = vadd.f32 %v633, %v638
        %v654 = vadd.f32 %v634, %v638
        %v655 = vadd.f32 %v635, %v638
        %656 = vst [vmem:[%s225] sm:$0xff] %v640
        %657 = vst [vmem:[%s225 + $0x8] sm:$0xff] %v641
        %658 = vst [vmem:[%s225 + $0x10] sm:$0xff] %v642
        %659 = vst [vmem:[%s225 + $0x18] sm:$0xff] %v643
        %660 = vst [vmem:[%s225 + $0x20] sm:$0xff] %v644
        %661 = vst [vmem:[%s225 + $0x28] sm:$0xff] %v645
        %662 = vst [vmem:[%s225 + $0x30] sm:$0xff] %v646
        %663 = vst [vmem:[%s225 + $0x38] sm:$0xff] %v647
        %664 = vst [vmem:[%s225 + $0x40] sm:$0xff] %v648
        %665 = vst [vmem:[%s225 + $0x48] sm:$0xff] %v649
        %666 = vst [vmem:[%s225 + $0x50] sm:$0xff] %v650
        %667 = vst [vmem:[%s225 + $0x58] sm:$0xff] %v651
        %668 = vst [vmem:[%s225 + $0x60] sm:$0xff] %v652
        %669 = vst [vmem:[%s225 + $0x68] sm:$0xff] %v653
        %670 = vst [vmem:[%s225 + $0x70] sm:$0xff] %v654
        %671 = vst [vmem:[%s225 + $0x78] sm:$0xff] %v655
      $region40: #{gcn_forward.5} parent=31 // pred_fallthru
        _
      %s672 = smul.u32 16, %s18
      %p673 = scmp.lt.s32.totalorder %s672, 31
      %s674 = scalar_select %p673, %s672, 31
      %s675 = smul.addr %s674, 8
      %s676 = scalar_lea.vmem %s3, %s675
      // Predicated region
      $region41: #{gcn_forward.5} parent=31 // pred_check
        %p677 = pneg %p119
      $region42: #{gcn_forward.5} parent=31 // pred_check_branch
        %679 = sbr.rel (%p677) target = $region44
      $region43: #{gcn_forward.5} parent=31 // pred_region
        %s680 = smul.u32 16, %s18
      $region44: #{gcn_forward.5} parent=31 // pred_fallthru
        _
    $region32: #{gcn_forward.5} parent=5 // pred_fallthru
      _
    %p681 = scmp.le.s32.totalorder 2, %s9
    // Predicated region
    $region45: #{gcn_forward.5} parent=5 // pred_check
      %p682 = pneg %p681
    $region46: #{gcn_forward.5} parent=5 // pred_check_branch
      %684 = sbr.rel (%p682) target = $region48
    $region47: #{gcn_forward.5} parent=5 // pred_region
      %s685 = ssub.s32 %s9, 2
      // Predicated region
      $region49: #{gcn_forward.5} parent=47 // pred_check
        %p686 = pneg %p125
      $region50: #{gcn_forward.5} parent=47 // pred_check_branch
        %688 = sbr.rel (%p686) target = $region52
      $region51: #{gcn_forward.5} parent=47 // pred_region
        %s689 = smul.u32 16, %s20
        %p690 = scmp.lt.s32.totalorder %s689, 31
        %s691 = scalar_select %p690, %s689, 31
        %s692 = smul.addr %s691, 8
        %s693 = scalar_lea.vmem %s3, %s692
      $region52: #{gcn_forward.5} parent=47 // pred_fallthru
        _
    $region48: #{gcn_forward.5} parent=5 // pred_fallthru
      _
  $region6: #{gcn_forward.5} parent=0 // loop_footer
    %s13 = sadd.s32 1, %s9
  $region7: #{gcn_forward.5} parent=0 // loop_footer_branch
    %8 = sbr.rel target = $region3
  $region8: #{gcn_forward.5} parent=0 // loop_exit
    _

// kernel: gcn_forward.4
$region0: #{gcn_forward.4}
  #allocation0 [shape = 'u32[]', space=smem, size = 0x4, offset = 0x4, fixed_abs, tag = 'smem constant byte address 0x4 - core index']
  #allocation1 [shape = 'u32[72,128]{1,0:T(1,128)}', space=vmem, size = 0x9000, scoped, tag = 'internal scratch']
  #allocation2 [shape = 'f32[128,128]{1,0:T(8,128)}', space=vmem, size = 0x10000, scoped, tag = 'scratch operand']
  %s0 = inlined_call_operand.vmem [shape: bf16[256,256], index: 0, kind: input, shape index: {}]
  %s1 = inlined_call_operand.vmem [shape: bf16[256,128], index: 1, kind: input, shape index: {}]
  %s2 = inlined_call_operand.vmem [shape: f32[1,128], index: 2, kind: input, shape index: {}]
  %s3 = inlined_call_operand.vmem [shape: bf16[128,128], index: 3, kind: input, shape index: {}]
  %s4 = inlined_call_operand.vmem [shape: bf16[256,128], index: 4, kind: output, shape index: {}]
  %s5 = sld [smem:[#allocation0]]
  $region57: #{gcn_forward.4} parent=0
    _
  %s7 = ssub.s32 1, %s5
  %s8 = scalar_select 0, %s7, %s5
  loop: start=0, step=1, limit=4
  $region2: #{gcn_forward.4} parent=0 // loop_pre_header
    _
  $region3: #{gcn_forward.4} parent=0 // loop_header
    %s10 = sphi 0, %s14
    %p11 = scmp.ge.s32.totalorder %s10, 4
    %s17 = sphi 0, %s29
    %s18 = sphi 0, %s25
    %s19 = sphi 0, %s17
    %s20 = sphi 0, %s18
    %s21 = sphi 0, %s19
    %s22 = sphi 0, %s20
    %s34 = sphi 0, %s36
    %s37 = sphi 0, %s34
    %s38 = sphi 0, %s37
    %s54 = sphi 0, %s38
    %s60 = sphi 0, %s62
    %s63 = sphi 0, %s60
    %s64 = sphi 0, %s63
    %s80 = sphi 0, %s64
    %s84 = sphi 0, %s84
    %s86 = sphi 0, %s84
    %s87 = sphi 0, %s86
    %s101 = sphi 0, %s87
    %s105 = sphi 0, %s105
    %s107 = sphi 0, %s105
    %s108 = sphi 0, %s107
    %s122 = sphi 0, %s108
    %s128 = sphi 0, %s130
    %s131 = sphi 0, %s128
    %s132 = sphi 0, %s131
    %s148 = sphi 0, %s132
  $region4: #{gcn_forward.4} parent=0 // loop_header_branch
    %13 = sbr.rel (%p11) target = $region8
  $region5: #{gcn_forward.4} parent=0 // loop_body
    %s15 = ssub.s32 %s10, 1
    %s16 = ssub.s32 %s10, 2
    %s23 = sadd.s32 1, %s18
    %p24 = scmp.ge.s32.totalorder %s23, 1
    %s25 = scalar_select %p24, 0, %s23
    %s26 = sadd.s32 1, %s17
    %s27 = scalar_select %p24, %s26, %s17
    %p28 = scmp.ge.s32.totalorder %s27, 2
    %s29 = scalar_select %p28, 0, %s27
    %s30 = ssub.s32 %s17, %s29
    %s31 = ssub.s32 %s18, %s25
    %s32 = sor.u32 %s30, %s31
    %p33 = scmp.eq.s32.totalorder %s32, 0
    %s35 = sadd.s32 %s34, 1
    %s36 = scalar_select %p33, %s34, %s35
    %p39 = pneg %p33
    %p40 = scmp.eq.s32.totalorder %s10, 1
    %p41 = por %p39, %p40
    %p42 = scmp.ne.s32.totalorder %s34, %s37
    %p43 = scmp.eq.s32.totalorder %s10, 0
    %p44 = por %p42, %p43
    %p45 = scmp.ne.s32.totalorder %s34, %s37
    %p46 = scmp.eq.s32.totalorder %s15, 1
    %p47 = por %p45, %p46
    %p48 = scmp.ne.s32.totalorder %s37, %s38
    %p49 = scmp.eq.s32.totalorder %s15, 0
    %p50 = por %p48, %p49
    %p51 = scmp.ne.s32.totalorder %s37, %s38
    %p52 = scmp.eq.s32.totalorder %s16, 1
    %p53 = por %p51, %p52
    %p55 = scmp.ne.s32.totalorder %s38, %s54
    %p56 = scmp.eq.s32.totalorder %s16, 0
    %p57 = por %p55, %p56
    %s58 = ssub.s32 %s18, %s25
    %p59 = scmp.eq.s32.totalorder %s58, 0
    %s61 = sadd.s32 %s60, 1
    %s62 = scalar_select %p59, %s60, %s61
    %p65 = pneg %p59
    %p66 = scmp.eq.s32.totalorder %s10, 1
    %p67 = por %p65, %p66
    %p68 = scmp.ne.s32.totalorder %s60, %s63
    %p69 = scmp.eq.s32.totalorder %s10, 0
    %p70 = por %p68, %p69
    %p71 = scmp.ne.s32.totalorder %s60, %s63
    %p72 = scmp.eq.s32.totalorder %s15, 1
    %p73 = por %p71, %p72
    %p74 = scmp.ne.s32.totalorder %s63, %s64
    %p75 = scmp.eq.s32.totalorder %s15, 0
    %p76 = por %p74, %p75
    %p77 = scmp.ne.s32.totalorder %s63, %s64
    %p78 = scmp.eq.s32.totalorder %s16, 1
    %p79 = por %p77, %p78
    %p81 = scmp.ne.s32.totalorder %s64, %s80
    %p82 = scmp.eq.s32.totalorder %s16, 0
    %p83 = por %p81, %p82
    %s85 = sadd.s32 %s84, 1
    %p88 = scmp.eq.s32.totalorder %s10, 1
    %p89 = scmp.ne.s32.totalorder %s84, %s86
    %p90 = scmp.eq.s32.totalorder %s10, 0
    %p91 = por %p89, %p90
    %p92 = scmp.ne.s32.totalorder %s84, %s86
    %p93 = scmp.eq.s32.totalorder %s15, 1
    %p94 = por %p92, %p93
    %p95 = scmp.ne.s32.totalorder %s86, %s87
    %p96 = scmp.eq.s32.totalorder %s15, 0
    %p97 = por %p95, %p96
    %p98 = scmp.ne.s32.totalorder %s86, %s87
    %p99 = scmp.eq.s32.totalorder %s16, 1
    %p100 = por %p98, %p99
    %p102 = scmp.ne.s32.totalorder %s87, %s101
    %p103 = scmp.eq.s32.totalorder %s16, 0
    %p104 = por %p102, %p103
    %s106 = sadd.s32 %s105, 1
    %p109 = scmp.eq.s32.totalorder %s10, 1
    %p110 = scmp.ne.s32.totalorder %s105, %s107
    %p111 = scmp.eq.s32.totalorder %s10, 0
    %p112 = por %p110, %p111
    %p113 = scmp.ne.s32.totalorder %s105, %s107
    %p114 = scmp.eq.s32.totalorder %s15, 1
    %p115 = por %p113, %p114
    %p116 = scmp.ne.s32.totalorder %s107, %s108
    %p117 = scmp.eq.s32.totalorder %s15, 0
    %p118 = por %p116, %p117
    %p119 = scmp.ne.s32.totalorder %s107, %s108
    %p120 = scmp.eq.s32.totalorder %s16, 1
    %p121 = por %p119, %p120
    %p123 = scmp.ne.s32.totalorder %s108, %s122
    %p124 = scmp.eq.s32.totalorder %s16, 0
    %p125 = por %p123, %p124
    %s126 = ssub.s32 %s17, %s29
    %p127 = scmp.eq.s32.totalorder %s126, 0
    %s129 = sadd.s32 %s128, 1
    %s130 = scalar_select %p127, %s128, %s129
    %p133 = pneg %p127
    %p134 = scmp.eq.s32.totalorder %s10, 1
    %p135 = por %p133, %p134
    %p136 = scmp.ne.s32.totalorder %s128, %s131
    %p137 = scmp.eq.s32.totalorder %s10, 0
    %p138 = por %p136, %p137
    %p139 = scmp.ne.s32.totalorder %s128, %s131
    %p140 = scmp.eq.s32.totalorder %s15, 1
    %p141 = por %p139, %p140
    %p142 = scmp.ne.s32.totalorder %s131, %s132
    %p143 = scmp.eq.s32.totalorder %s15, 0
    %p144 = por %p142, %p143
    %p145 = scmp.ne.s32.totalorder %s131, %s132
    %p146 = scmp.eq.s32.totalorder %s16, 1
    %p147 = por %p145, %p146
    %p149 = scmp.ne.s32.totalorder %s132, %s148
    %p150 = scmp.eq.s32.totalorder %s16, 0
    %p151 = por %p149, %p150
    %p152 = scmp.le.s32.totalorder 1, %s10
    %p153 = scmp.lt.s32.totalorder %s10, 3
    %p154 = pnand %p152, %p153
    %p155 = pneg %p154
    // Predicated region
    $region9: #{gcn_forward.4} parent=5 // pred_check
      _
    $region10: #{gcn_forward.4} parent=5 // pred_check_branch
      %157 = sbr.rel (%p154) target = $region12
    $region11: #{gcn_forward.4} parent=5 // pred_region
      %s158 = ssub.s32 %s10, 1
      // Predicated region
      $region13: #{gcn_forward.4} parent=11 // pred_check
        %p159 = pneg %p76
      $region14: #{gcn_forward.4} parent=11 // pred_check_branch
        %161 = sbr.rel (%p159) target = $region16
      $region15: #{gcn_forward.4} parent=11 // pred_region
        %s162 = smul.u32 32, %s20
        %p163 = scmp.lt.s32.totalorder %s162, 31
        %s164 = scalar_select %p163, %s162, 31
        %s165 = smul.addr %s164, 4
        %s166 = scalar_lea.vmem %s1, %s165
        %s167 = smul.u32 32, %s20
      $region16: #{gcn_forward.4} parent=11 // pred_fallthru
        _
      // Predicated region
      $region17: #{gcn_forward.4} parent=11 // pred_check
        %p168 = pneg %p97
      $region18: #{gcn_forward.4} parent=11 // pred_check_branch
        %170 = sbr.rel (%p168) target = $region20
      $region19: #{gcn_forward.4} parent=11 // pred_region
        _
      $region20: #{gcn_forward.4} parent=11 // pred_fallthru
        _
      // Predicated region
      $region21: #{gcn_forward.4} parent=11 // pred_check
        %p171 = pneg %p118
      $region22: #{gcn_forward.4} parent=11 // pred_check_branch
        %173 = sbr.rel (%p171) target = $region24
      $region23: #{gcn_forward.4} parent=11 // pred_region
        _
      $region24: #{gcn_forward.4} parent=11 // pred_fallthru
        _
    $region12: #{gcn_forward.4} parent=5 // pred_fallthru
      _
    %p174 = scmp.lt.s32.totalorder %s10, 2
    // Predicated region
    $region25: #{gcn_forward.4} parent=5 // pred_check
      %p175 = pneg %p174
    $region26: #{gcn_forward.4} parent=5 // pred_check_branch
      %177 = sbr.rel (%p175) target = $region28
    $region27: #{gcn_forward.4} parent=5 // pred_region
      // Predicated region
      $region29: #{gcn_forward.4} parent=27 // pred_check
        %p178 = pneg %p44
      $region30: #{gcn_forward.4} parent=27 // pred_check_branch
        %180 = sbr.rel (%p178) target = $region32
      $region31: #{gcn_forward.4} parent=27 // pred_region
        %s181 = smul.u32 16, %s17
        %s182 = smul.u32 2, %s18
        %p183 = scmp.lt.s32.totalorder %s181, 31
        %s184 = scalar_select %p183, %s181, 31
        %p185 = scmp.lt.s32.totalorder %s182, 1
        %s186 = scalar_select %p185, %s182, 1
        %s187 = smul.addr %s184, 2
        %s188 = sadd.s32 %s186, %s187
        %s189 = smul.addr %s188, 4
        %s190 = scalar_lea.vmem %s0, %s189
        %s191 = smul.u32 16, %s17
        %s192 = smul.u32 2, %s18
      $region32: #{gcn_forward.4} parent=27 // pred_fallthru
        _
    $region28: #{gcn_forward.4} parent=5 // pred_fallthru
      _
    %p193 = scmp.le.s32.totalorder 1, %s10
    %p194 = scmp.lt.s32.totalorder %s10, 3
    %p195 = pnand %p193, %p194
    %p196 = pneg %p195
    // Predicated region
    $region33: #{gcn_forward.4} parent=5 // pred_check
      _
    $region34: #{gcn_forward.4} parent=5 // pred_check_branch
      %198 = sbr.rel (%p195) target = $region36
    $region35: #{gcn_forward.4} parent=5 // pred_region
      %s199 = ssub.s32 %s10, 1
      %s200 = smul.u32 16, %s19
      %s201 = smul.u32 2, %s20
      %p202 = scmp.lt.s32.totalorder %s200, 31
      %s203 = scalar_select %p202, %s200, 31
      %p204 = scmp.lt.s32.totalorder %s201, 1
      %s205 = scalar_select %p204, %s201, 1
      %s206 = smul.addr %s203, 2
      %s207 = sadd.s32 %s205, %s206
      %s208 = smul.addr %s207, 4
      %s209 = scalar_lea.vmem %s0, %s208
      %p210 = pneg %p50
      %p211 = pneg %p47
      %s212 = smul.u32 32, %s20
      %p213 = scmp.lt.s32.totalorder %s212, 31
      %s214 = scalar_select %p213, %s212, 31
      %s215 = smul.addr %s214, 4
      %s216 = scalar_lea.vmem %s1, %s215
      %p217 = pneg %p76
      %p218 = pneg %p73
      %p219 = pneg %p97
      %p220 = pneg %p94
      %p221 = pneg %p118
      %p222 = pneg %p115
      %p223 = pneg %p144
      %p224 = pneg %p141
      %s225 = smul.u32 16, %s19
      %p226 = scmp.lt.s32.totalorder %s225, 31
      %s227 = scalar_select %p226, %s225, 31
      %s228 = smul.addr %s227, 4
      %s229 = scalar_lea.vmem %s4, %s228
      %s230 = smul.u32 16, %s19
      %s231 = smul.u32 2, %s20
      %p232 = scmp.lt.s32.totalorder %s230, 31
      %s233 = scalar_select %p232, %s230, 31
      %p234 = scmp.lt.s32.totalorder %s231, 1
      %s235 = scalar_select %p234, %s231, 1
      %s236 = smul.addr %s233, 2
      %s237 = sadd.s32 %s235, %s236
      %s238 = smul.addr %s237, 4
      %s239 = scalar_lea.vmem %s0, %s238
      %s240 = smul.u32 16, %s19
      %s241 = smul.u32 2, %s20
      %s242 = smul.u32 32, %s20
      %p243 = scmp.lt.s32.totalorder %s242, 31
      %s244 = scalar_select %p243, %s242, 31
      %s245 = smul.addr %s244, 4
      %s246 = scalar_lea.vmem %s1, %s245
      %s247 = smul.u32 32, %s20
      %s248 = smul.u32 16, %s19
      %p249 = scmp.lt.s32.totalorder %s248, 31
      %s250 = scalar_select %p249, %s248, 31
      %s251 = smul.addr %s250, 4
      %s252 = scalar_lea.vmem %s4, %s251
      %s253 = smul.u32 16, %s19
      %p254 = scmp.eq.s32.totalorder %s20, 0
      // Predicated region
      $region37: #{gcn_forward.4} parent=35 // pred_check
        %p255 = pneg %p254
      $region38: #{gcn_forward.4} parent=35 // pred_check_branch
        %257 = sbr.rel (%p255) target = $region40
      $region39: #{gcn_forward.4} parent=35 // pred_region
        %258 = vst [vmem:[#allocation2] sm:$0xff] 0.0
        %259 = vst [vmem:[#allocation2 + $0x8] sm:$0xff] 0.0
        %260 = vst [vmem:[#allocation2 + $0x10] sm:$0xff] 0.0
        %261 = vst [vmem:[#allocation2 + $0x18] sm:$0xff] 0.0
        %262 = vst [vmem:[#allocation2 + $0x20] sm:$0xff] 0.0
        %263 = vst [vmem:[#allocation2 + $0x28] sm:$0xff] 0.0
        %264 = vst [vmem:[#allocation2 + $0x30] sm:$0xff] 0.0
        %265 = vst [vmem:[#allocation2 + $0x38] sm:$0xff] 0.0
        %266 = vst [vmem:[#allocation2 + $0x40] sm:$0xff] 0.0
        %267 = vst [vmem:[#allocation2 + $0x48] sm:$0xff] 0.0
        %268 = vst [vmem:[#allocation2 + $0x50] sm:$0xff] 0.0
        %269 = vst [vmem:[#allocation2 + $0x58] sm:$0xff] 0.0
        %270 = vst [vmem:[#allocation2 + $0x60] sm:$0xff] 0.0
        %271 = vst [vmem:[#allocation2 + $0x68] sm:$0xff] 0.0
        %272 = vst [vmem:[#allocation2 + $0x70] sm:$0xff] 0.0
        %273 = vst [vmem:[#allocation2 + $0x78] sm:$0xff] 0.0
      $region40: #{gcn_forward.4} parent=35 // pred_fallthru
        _
      %v274 = vld [vmem:[#allocation2] sm:$0xff]
      %v275 = vld [vmem:[#allocation2 + $0x8] sm:$0xff]
      %v276 = vld [vmem:[#allocation2 + $0x10] sm:$0xff]
      %v277 = vld [vmem:[#allocation2 + $0x18] sm:$0xff]
      %v278 = vld [vmem:[#allocation2 + $0x20] sm:$0xff]
      %v279 = vld [vmem:[#allocation2 + $0x28] sm:$0xff]
      %v280 = vld [vmem:[#allocation2 + $0x30] sm:$0xff]
      %v281 = vld [vmem:[#allocation2 + $0x38] sm:$0xff]
      %v282 = vld [vmem:[#allocation2 + $0x40] sm:$0xff]
      %v283 = vld [vmem:[#allocation2 + $0x48] sm:$0xff]
      %v284 = vld [vmem:[#allocation2 + $0x50] sm:$0xff]
      %v285 = vld [vmem:[#allocation2 + $0x58] sm:$0xff]
      %v286 = vld [vmem:[#allocation2 + $0x60] sm:$0xff]
      %v287 = vld [vmem:[#allocation2 + $0x68] sm:$0xff]
      %v288 = vld [vmem:[#allocation2 + $0x70] sm:$0xff]
      %v289 = vld [vmem:[#allocation2 + $0x78] sm:$0xff]
      %v290 = vld [vmem:[%s239] sm:$0xff]
      %v291 = vld [vmem:[%s239 + $0x8] sm:$0xff]
      %v292 = vld [vmem:[%s239 + $0x10] sm:$0xff]
      %v293 = vld [vmem:[%s239 + $0x18] sm:$0xff]
      %v294 = vld [vmem:[%s239 + $0x20] sm:$0xff]
      %v295 = vld [vmem:[%s239 + $0x28] sm:$0xff]
      %v296 = vld [vmem:[%s239 + $0x30] sm:$0xff]
      %v297 = vld [vmem:[%s239 + $0x38] sm:$0xff]
      %v298 = vld [vmem:[%s239 + $0x40] sm:$0xff]
      %v299 = vld [vmem:[%s239 + $0x48] sm:$0xff]
      %v300 = vld [vmem:[%s239 + $0x50] sm:$0xff]
      %v301 = vld [vmem:[%s239 + $0x58] sm:$0xff]
      %v302 = vld [vmem:[%s239 + $0x60] sm:$0xff]
      %v303 = vld [vmem:[%s239 + $0x68] sm:$0xff]
      %v304 = vld [vmem:[%s239 + $0x70] sm:$0xff]
      %v305 = vld [vmem:[%s239 + $0x78] sm:$0xff]
      %v306 = vld [vmem:[%s246] sm:$0xf]
      %v307 = vld [vmem:[%s246 + $0x4] sm:$0xf]
      %v308 = vld [vmem:[%s246 + $0x8] sm:$0xf]
      %v309 = vld [vmem:[%s246 + $0xc] sm:$0xf]
      %v310 = vld [vmem:[%s246 + $0x10] sm:$0xf]
      %v311 = vld [vmem:[%s246 + $0x14] sm:$0xf]
      %v312 = vld [vmem:[%s246 + $0x18] sm:$0xf]
      %v313 = vld [vmem:[%s246 + $0x1c] sm:$0xf]
      %v314 = vld [vmem:[%s246 + $0x20] sm:$0xf]
      %v315 = vld [vmem:[%s246 + $0x24] sm:$0xf]
      %v316 = vld [vmem:[%s246 + $0x28] sm:$0xf]
      %v317 = vld [vmem:[%s246 + $0x2c] sm:$0xf]
      %v318 = vld [vmem:[%s246 + $0x30] sm:$0xf]
      %v319 = vld [vmem:[%s246 + $0x34] sm:$0xf]
      %v320 = vld [vmem:[%s246 + $0x38] sm:$0xf]
      %v321 = vld [vmem:[%s246 + $0x3c] sm:$0xf]
      %v322 = vld [vmem:[%s246 + $0x40] sm:$0xf]
      %v323 = vld [vmem:[%s246 + $0x44] sm:$0xf]
      %v324 = vld [vmem:[%s246 + $0x48] sm:$0xf]
      %v325 = vld [vmem:[%s246 + $0x4c] sm:$0xf]
      %v326 = vld [vmem:[%s246 + $0x50] sm:$0xf]
      %v327 = vld [vmem:[%s246 + $0x54] sm:$0xf]
      %v328 = vld [vmem:[%s246 + $0x58] sm:$0xf]
      %v329 = vld [vmem:[%s246 + $0x5c] sm:$0xf]
      %v330 = vld [vmem:[%s246 + $0x60] sm:$0xf]
      %v331 = vld [vmem:[%s246 + $0x64] sm:$0xf]
      %v332 = vld [vmem:[%s246 + $0x68] sm:$0xf]
      %v333 = vld [vmem:[%s246 + $0x6c] sm:$0xf]
      %v334 = vld [vmem:[%s246 + $0x70] sm:$0xf]
      %v335 = vld [vmem:[%s246 + $0x74] sm:$0xf]
      %v336 = vld [vmem:[%s246 + $0x78] sm:$0xf]
      %v337 = vld [vmem:[%s246 + $0x7c] sm:$0xf]
      %v354 = vunpack.c.l.b16 %v290
      %v355 = vunpack.c.h.b16 %v290
      %v356 = vunpack.c.l.b16 %v291
      %v357 = vunpack.c.h.b16 %v291
      %v358 = vunpack.c.l.b16 %v292
      %v359 = vunpack.c.h.b16 %v292
      %v360 = vunpack.c.l.b16 %v293
      %v361 = vunpack.c.h.b16 %v293
      %v362 = vunpack.c.l.b16 %v294
      %v363 = vunpack.c.h.b16 %v294
      %v364 = vunpack.c.l.b16 %v295
      %v365 = vunpack.c.h.b16 %v295
      %v366 = vunpack.c.l.b16 %v296
      %v367 = vunpack.c.h.b16 %v296
      %v368 = vunpack.c.l.b16 %v297
      %v369 = vunpack.c.h.b16 %v297
      %v370 = vunpack.c.l.b16 %v298
      %v371 = vunpack.c.h.b16 %v298
      %v372 = vunpack.c.l.b16 %v299
      %v373 = vunpack.c.h.b16 %v299
      %v374 = vunpack.c.l.b16 %v300
      %v375 = vunpack.c.h.b16 %v300
      %v376 = vunpack.c.l.b16 %v301
      %v377 = vunpack.c.h.b16 %v301
      %v378 = vunpack.c.l.b16 %v302
      %v379 = vunpack.c.h.b16 %v302
      %v380 = vunpack.c.l.b16 %v303
      %v381 = vunpack.c.h.b16 %v303
      %v382 = vunpack.c.l.b16 %v304
      %v383 = vunpack.c.h.b16 %v304
      %v384 = vunpack.c.l.b16 %v305
      %v385 = vunpack.c.h.b16 %v305
      %v386 = vpack.c.b16 %v356, %v354
      %v387 = vpack.c.b16 %v357, %v355
      %v388 = vpack.c.b16 %v360, %v358
      %v389 = vpack.c.b16 %v361, %v359
      %v390 = vpack.c.b16 %v364, %v362
      %v391 = vpack.c.b16 %v365, %v363
      %v392 = vpack.c.b16 %v368, %v366
      %v393 = vpack.c.b16 %v369, %v367
      %v394 = vpack.c.b16 %v372, %v370
      %v395 = vpack.c.b16 %v373, %v371
      %v396 = vpack.c.b16 %v376, %v374
      %v397 = vpack.c.b16 %v377, %v375
      %v398 = vpack.c.b16 %v380, %v378
      %v399 = vpack.c.b16 %v381, %v379
      %v400 = vpack.c.b16 %v384, %v382
      %v401 = vpack.c.b16 %v385, %v383
      %v450 = vunpack.c.l.b16 %v306
      %v451 = vunpack.c.l.b16 %v307
      %v452 = vunpack.c.l.b16 %v308
      %v453 = vunpack.c.l.b16 %v309
      %v454 = vunpack.c.l.b16 %v310
      %v455 = vunpack.c.l.b16 %v311
      %v456 = vunpack.c.l.b16 %v312
      %v457 = vunpack.c.l.b16 %v313
      %v458 = vunpack.c.l.b16 %v314
      %v459 = vunpack.c.l.b16 %v315
      %v460 = vunpack.c.l.b16 %v316
      %v461 = vunpack.c.l.b16 %v317
      %v462 = vunpack.c.l.b16 %v318
      %v463 = vunpack.c.l.b16 %v319
      %v464 = vunpack.c.l.b16 %v320
      %v465 = vunpack.c.l.b16 %v321
      %v466 = vunpack.c.l.b16 %v322
      %v467 = vunpack.c.l.b16 %v323
      %v468 = vunpack.c.l.b16 %v324
      %v469 = vunpack.c.l.b16 %v325
      %v470 = vunpack.c.l.b16 %v326
      %v471 = vunpack.c.l.b16 %v327
      %v472 = vunpack.c.l.b16 %v328
      %v473 = vunpack.c.l.b16 %v329
      %v474 = vunpack.c.l.b16 %v330
      %v475 = vunpack.c.l.b16 %v331
      %v476 = vunpack.c.l.b16 %v332
      %v477 = vunpack.c.l.b16 %v333
      %v478 = vunpack.c.l.b16 %v334
      %v479 = vunpack.c.l.b16 %v335
      %v480 = vunpack.c.l.b16 %v336
      %v481 = vunpack.c.l.b16 %v337
      %v482 = vpack.c.b16 %v451, %v450
      %v483 = vpack.c.b16 %v453, %v452
      %v484 = vpack.c.b16 %v455, %v454
      %v485 = vpack.c.b16 %v457, %v456
      %v486 = vpack.c.b16 %v459, %v458
      %v487 = vpack.c.b16 %v461, %v460
      %v488 = vpack.c.b16 %v463, %v462
      %v489 = vpack.c.b16 %v465, %v464
      %v490 = vpack.c.b16 %v467, %v466
      %v491 = vpack.c.b16 %v469, %v468
      %v492 = vpack.c.b16 %v471, %v470
      %v493 = vpack.c.b16 %v473, %v472
      %v494 = vpack.c.b16 %v475, %v474
      %v495 = vpack.c.b16 %v477, %v476
      %v496 = vpack.c.b16 %v479, %v478
      %v497 = vpack.c.b16 %v481, %v480
      %514 = vmatpush.bf16.msra.mxu0 %v489
      %515 = vmatpush.bf16.msra.mxu0 %v488
      %516 = vmatpush.bf16.msra.mxu0 %v487
      %517 = vmatpush.bf16.msra.mxu0 %v486
      %518 = vmatpush.bf16.msra.mxu0 %v485
      %519 = vmatpush.bf16.msra.mxu0 %v484
      %520 = vmatpush.bf16.msra.mxu0 %v483
      %521 = vmatpush.bf16.msra.mxu0 %v482
      %522 = vmatmul.bf16.gmra.mxu0 %v386
      %v523 = vpop.f32.mrf.mxu0
      %v524 = vadd.f32 0.0, %v523
      %v525 = vpop.f32.mrf.mxu0
      %v526 = vadd.f32 0.0, %v525
      %527 = vmatmul.bf16.gmra.mxu0 %v388
      %v528 = vpop.f32.mrf.mxu0
      %v529 = vadd.f32 0.0, %v528
      %v530 = vpop.f32.mrf.mxu0
      %v531 = vadd.f32 0.0, %v530
      %532 = vmatmul.bf16.gmra.mxu0 %v390
      %v533 = vpop.f32.mrf.mxu0
      %v534 = vadd.f32 0.0, %v533
      %v535 = vpop.f32.mrf.mxu0
      %v536 = vadd.f32 0.0, %v535
      %537 = vmatmul.bf16.gmra.mxu0 %v392
      %v538 = vpop.f32.mrf.mxu0
      %v539 = vadd.f32 0.0, %v538
      %v540 = vpop.f32.mrf.mxu0
      %v541 = vadd.f32 0.0, %v540
      %542 = vmatmul.bf16.gmra.mxu0 %v394
      %v543 = vpop.f32.mrf.mxu0
      %v544 = vadd.f32 0.0, %v543
      %v545 = vpop.f32.mrf.mxu0
      %v546 = vadd.f32 0.0, %v545
      %547 = vmatmul.bf16.gmra.mxu0 %v396
      %v548 = vpop.f32.mrf.mxu0
      %v549 = vadd.f32 0.0, %v548
      %v550 = vpop.f32.mrf.mxu0
      %v551 = vadd.f32 0.0, %v550
      %552 = vmatmul.bf16.gmra.mxu0 %v398
      %v553 = vpop.f32.mrf.mxu0
      %v554 = vadd.f32 0.0, %v553
      %v555 = vpop.f32.mrf.mxu0
      %v556 = vadd.f32 0.0, %v555
      %557 = vmatmul.bf16.gmra.mxu0 %v400
      %v558 = vpop.f32.mrf.mxu0
      %v559 = vadd.f32 0.0, %v558
      %v560 = vpop.f32.mrf.mxu0
      %v561 = vadd.f32 0.0, %v560
      %562 = vdwg.mxu0
      %563 = vmatpush.bf16.msra.mxu0 %v497
      %564 = vmatpush.bf16.msra.mxu0 %v496
      %565 = vmatpush.bf16.msra.mxu0 %v495
      %566 = vmatpush.bf16.msra.mxu0 %v494
      %567 = vmatpush.bf16.msra.mxu0 %v493
      %568 = vmatpush.bf16.msra.mxu0 %v492
      %569 = vmatpush.bf16.msra.mxu0 %v491
      %570 = vmatpush.bf16.msra.mxu0 %v490
      %571 = vmatmul.bf16.gmra.mxu0 %v387
      %v572 = vpop.f32.mrf.mxu0
      %v573 = vadd.f32 %v524, %v572
      %v574 = vpop.f32.mrf.mxu0
      %v575 = vadd.f32 %v526, %v574
      %576 = vmatmul.bf16.gmra.mxu0 %v389
      %v577 = vpop.f32.mrf.mxu0
      %v578 = vadd.f32 %v529, %v577
      %v579 = vpop.f32.mrf.mxu0
      %v580 = vadd.f32 %v531, %v579
      %581 = vmatmul.bf16.gmra.mxu0 %v391
      %v582 = vpop.f32.mrf.mxu0
      %v583 = vadd.f32 %v534, %v582
      %v584 = vpop.f32.mrf.mxu0
      %v585 = vadd.f32 %v536, %v584
      %586 = vmatmul.bf16.gmra.mxu0 %v393
      %v587 = vpop.f32.mrf.mxu0
      %v588 = vadd.f32 %v539, %v587
      %v589 = vpop.f32.mrf.mxu0
      %v590 = vadd.f32 %v541, %v589
      %591 = vmatmul.bf16.gmra.mxu0 %v395
      %v592 = vpop.f32.mrf.mxu0
      %v593 = vadd.f32 %v544, %v592
      %v594 = vpop.f32.mrf.mxu0
      %v595 = vadd.f32 %v546, %v594
      %596 = vmatmul.bf16.gmra.mxu0 %v397
      %v597 = vpop.f32.mrf.mxu0
      %v598 = vadd.f32 %v549, %v597
      %v599 = vpop.f32.mrf.mxu0
      %v600 = vadd.f32 %v551, %v599
      %601 = vmatmul.bf16.gmra.mxu0 %v399
      %v602 = vpop.f32.mrf.mxu0
      %v603 = vadd.f32 %v554, %v602
      %v604 = vpop.f32.mrf.mxu0
      %v605 = vadd.f32 %v556, %v604
      %606 = vmatmul.bf16.gmra.mxu0 %v401
      %v607 = vpop.f32.mrf.mxu0
      %v608 = vadd.f32 %v559, %v607
      %v609 = vpop.f32.mrf.mxu0
      %v610 = vadd.f32 %v561, %v609
      %611 = vdwg.mxu0
      %v612 = vadd.f32 %v274, %v573
      %v613 = vadd.f32 %v275, %v575
      %v614 = vadd.f32 %v276, %v578
      %v615 = vadd.f32 %v277, %v580
      %v616 = vadd.f32 %v278, %v583
      %v617 = vadd.f32 %v279, %v585
      %v618 = vadd.f32 %v280, %v588
      %v619 = vadd.f32 %v281, %v590
      %v620 = vadd.f32 %v282, %v593
      %v621 = vadd.f32 %v283, %v595
      %v622 = vadd.f32 %v284, %v598
      %v623 = vadd.f32 %v285, %v600
      %v624 = vadd.f32 %v286, %v603
      %v625 = vadd.f32 %v287, %v605
      %v626 = vadd.f32 %v288, %v608
      %v627 = vadd.f32 %v289, %v610
      %628 = vst [vmem:[#allocation2] sm:$0xff] %v612
      %629 = vst [vmem:[#allocation2 + $0x8] sm:$0xff] %v613
      %630 = vst [vmem:[#allocation2 + $0x10] sm:$0xff] %v614
      %631 = vst [vmem:[#allocation2 + $0x18] sm:$0xff] %v615
      %632 = vst [vmem:[#allocation2 + $0x20] sm:$0xff] %v616
      %633 = vst [vmem:[#allocation2 + $0x28] sm:$0xff] %v617
      %634 = vst [vmem:[#allocation2 + $0x30] sm:$0xff] %v618
      %635 = vst [vmem:[#allocation2 + $0x38] sm:$0xff] %v619
      %636 = vst [vmem:[#allocation2 + $0x40] sm:$0xff] %v620
      %637 = vst [vmem:[#allocation2 + $0x48] sm:$0xff] %v621
      %638 = vst [vmem:[#allocation2 + $0x50] sm:$0xff] %v622
      %639 = vst [vmem:[#allocation2 + $0x58] sm:$0xff] %v623
      %640 = vst [vmem:[#allocation2 + $0x60] sm:$0xff] %v624
      %641 = vst [vmem:[#allocation2 + $0x68] sm:$0xff] %v625
      %642 = vst [vmem:[#allocation2 + $0x70] sm:$0xff] %v626
      %643 = vst [vmem:[#allocation2 + $0x78] sm:$0xff] %v627
      // Predicated region
      $region41: #{gcn_forward.4} parent=35 // pred_check
        %p644 = pneg %p254
      $region42: #{gcn_forward.4} parent=35 // pred_check_branch
        %646 = sbr.rel (%p644) target = $region44
      $region43: #{gcn_forward.4} parent=35 // pred_region
        %v647 = vld [vmem:[#allocation2] sm:$0xff]
        %v648 = vld [vmem:[#allocation2 + $0x8] sm:$0xff]
        %v649 = vld [vmem:[#allocation2 + $0x10] sm:$0xff]
        %v650 = vld [vmem:[#allocation2 + $0x18] sm:$0xff]
        %v651 = vld [vmem:[#allocation2 + $0x20] sm:$0xff]
        %v652 = vld [vmem:[#allocation2 + $0x28] sm:$0xff]
        %v653 = vld [vmem:[#allocation2 + $0x30] sm:$0xff]
        %v654 = vld [vmem:[#allocation2 + $0x38] sm:$0xff]
        %v655 = vld [vmem:[#allocation2 + $0x40] sm:$0xff]
        %v656 = vld [vmem:[#allocation2 + $0x48] sm:$0xff]
        %v657 = vld [vmem:[#allocation2 + $0x50] sm:$0xff]
        %v658 = vld [vmem:[#allocation2 + $0x58] sm:$0xff]
        %v659 = vld [vmem:[#allocation2 + $0x60] sm:$0xff]
        %v660 = vld [vmem:[#allocation2 + $0x68] sm:$0xff]
        %v661 = vld [vmem:[#allocation2 + $0x70] sm:$0xff]
        %v662 = vld [vmem:[#allocation2 + $0x78] sm:$0xff]
        %v663 = vld [vmem:[%s2] sm:$0x1]
        %v665 = vperm.slane %v663, 0
        %v667 = vadd.f32 %v647, %v665
        %v668 = vadd.f32 %v648, %v665
        %v669 = vadd.f32 %v649, %v665
        %v670 = vadd.f32 %v650, %v665
        %v671 = vadd.f32 %v651, %v665
        %v672 = vadd.f32 %v652, %v665
        %v673 = vadd.f32 %v653, %v665
        %v674 = vadd.f32 %v654, %v665
        %v675 = vadd.f32 %v655, %v665
        %v676 = vadd.f32 %v656, %v665
        %v677 = vadd.f32 %v657, %v665
        %v678 = vadd.f32 %v658, %v665
        %v679 = vadd.f32 %v659, %v665
        %v680 = vadd.f32 %v660, %v665
        %v681 = vadd.f32 %v661, %v665
        %v682 = vadd.f32 %v662, %v665
        %v683 = vmax.f32 %v667, 0.0
        %v684 = vmax.f32 %v668, 0.0
        %v685 = vmax.f32 %v669, 0.0
        %v686 = vmax.f32 %v670, 0.0
        %v687 = vmax.f32 %v671, 0.0
        %v688 = vmax.f32 %v672, 0.0
        %v689 = vmax.f32 %v673, 0.0
        %v690 = vmax.f32 %v674, 0.0
        %v691 = vmax.f32 %v675, 0.0
        %v692 = vmax.f32 %v676, 0.0
        %v693 = vmax.f32 %v677, 0.0
        %v694 = vmax.f32 %v678, 0.0
        %v695 = vmax.f32 %v679, 0.0
        %v696 = vmax.f32 %v680, 0.0
        %v697 = vmax.f32 %v681, 0.0
        %v698 = vmax.f32 %v682, 0.0
        %v699 = vpack.c.bf16 %v684, %v683
        %v700 = vpack.c.bf16 %v686, %v685
        %v701 = vpack.c.bf16 %v688, %v687
        %v702 = vpack.c.bf16 %v690, %v689
        %v703 = vpack.c.bf16 %v692, %v691
        %v704 = vpack.c.bf16 %v694, %v693
        %v705 = vpack.c.bf16 %v696, %v695
        %v706 = vpack.c.bf16 %v698, %v697
        %v707 = vld [vmem:[%s3] sm:$0xf]
        %v708 = vld [vmem:[%s3 + $0x4] sm:$0xf]
        %v709 = vld [vmem:[%s3 + $0x8] sm:$0xf]
        %v710 = vld [vmem:[%s3 + $0xc] sm:$0xf]
        %v711 = vld [vmem:[%s3 + $0x10] sm:$0xf]
        %v712 = vld [vmem:[%s3 + $0x14] sm:$0xf]
        %v713 = vld [vmem:[%s3 + $0x18] sm:$0xf]
        %v714 = vld [vmem:[%s3 + $0x1c] sm:$0xf]
        %v715 = vld [vmem:[%s3 + $0x20] sm:$0xf]
        %v716 = vld [vmem:[%s3 + $0x24] sm:$0xf]
        %v717 = vld [vmem:[%s3 + $0x28] sm:$0xf]
        %v718 = vld [vmem:[%s3 + $0x2c] sm:$0xf]
        %v719 = vld [vmem:[%s3 + $0x30] sm:$0xf]
        %v720 = vld [vmem:[%s3 + $0x34] sm:$0xf]
        %v721 = vld [vmem:[%s3 + $0x38] sm:$0xf]
        %v722 = vld [vmem:[%s3 + $0x3c] sm:$0xf]
        %v739 = vunpack.c.l.b16 %v707
        %v740 = vunpack.c.l.b16 %v708
        %v741 = vunpack.c.l.b16 %v709
        %v742 = vunpack.c.l.b16 %v710
        %v743 = vunpack.c.l.b16 %v711
        %v744 = vunpack.c.l.b16 %v712
        %v745 = vunpack.c.l.b16 %v713
        %v746 = vunpack.c.l.b16 %v714
        %v747 = vunpack.c.l.b16 %v715
        %v748 = vunpack.c.l.b16 %v716
        %v749 = vunpack.c.l.b16 %v717
        %v750 = vunpack.c.l.b16 %v718
        %v751 = vunpack.c.l.b16 %v719
        %v752 = vunpack.c.l.b16 %v720
        %v753 = vunpack.c.l.b16 %v721
        %v754 = vunpack.c.l.b16 %v722
        %v755 = vpack.c.b16 %v740, %v739
        %v756 = vpack.c.b16 %v742, %v741
        %v757 = vpack.c.b16 %v744, %v743
        %v758 = vpack.c.b16 %v746, %v745
        %v759 = vpack.c.b16 %v748, %v747
        %v760 = vpack.c.b16 %v750, %v749
        %v761 = vpack.c.b16 %v752, %v751
        %v762 = vpack.c.b16 %v754, %v753
        %771 = vmatpush.bf16.msra.mxu0 %v762
        %772 = vmatpush.bf16.msra.mxu0 %v761
        %773 = vmatpush.bf16.msra.mxu0 %v760
        %774 = vmatpush.bf16.msra.mxu0 %v759
        %775 = vmatpush.bf16.msra.mxu0 %v758
        %776 = vmatpush.bf16.msra.mxu0 %v757
        %777 = vmatpush.bf16.msra.mxu0 %v756
        %778 = vmatpush.bf16.msra.mxu0 %v755
        %779 = vmatmul.bf16.gmra.mxu0 %v699
        %v780 = vpop.f32.mrf.mxu0
        %v781 = vadd.f32 0.0, %v780
        %v782 = vpop.f32.mrf.mxu0
        %v783 = vadd.f32 0.0, %v782
        %784 = vmatmul.bf16.gmra.mxu0 %v700
        %v785 = vpop.f32.mrf.mxu0
        %v786 = vadd.f32 0.0, %v785
        %v787 = vpop.f32.mrf.mxu0
        %v788 = vadd.f32 0.0, %v787
        %789 = vmatmul.bf16.gmra.mxu0 %v701
        %v790 = vpop.f32.mrf.mxu0
        %v791 = vadd.f32 0.0, %v790
        %v792 = vpop.f32.mrf.mxu0
        %v793 = vadd.f32 0.0, %v792
        %794 = vmatmul.bf16.gmra.mxu0 %v702
        %v795 = vpop.f32.mrf.mxu0
        %v796 = vadd.f32 0.0, %v795
        %v797 = vpop.f32.mrf.mxu0
        %v798 = vadd.f32 0.0, %v797
        %799 = vmatmul.bf16.gmra.mxu0 %v703
        %v800 = vpop.f32.mrf.mxu0
        %v801 = vadd.f32 0.0, %v800
        %v802 = vpop.f32.mrf.mxu0
        %v803 = vadd.f32 0.0, %v802
        %804 = vmatmul.bf16.gmra.mxu0 %v704
        %v805 = vpop.f32.mrf.mxu0
        %v806 = vadd.f32 0.0, %v805
        %v807 = vpop.f32.mrf.mxu0
        %v808 = vadd.f32 0.0, %v807
        %809 = vmatmul.bf16.gmra.mxu0 %v705
        %v810 = vpop.f32.mrf.mxu0
        %v811 = vadd.f32 0.0, %v810
        %v812 = vpop.f32.mrf.mxu0
        %v813 = vadd.f32 0.0, %v812
        %814 = vmatmul.bf16.gmra.mxu0 %v706
        %v815 = vpop.f32.mrf.mxu0
        %v816 = vadd.f32 0.0, %v815
        %v817 = vpop.f32.mrf.mxu0
        %v818 = vadd.f32 0.0, %v817
        %819 = vdwg.mxu0
        %v820 = vpack.c.bf16 %v781, %v781
        %v821 = vpack.c.bf16 %v783, %v783
        %v822 = vpack.c.bf16 %v786, %v786
        %v823 = vpack.c.bf16 %v788, %v788
        %v824 = vpack.c.bf16 %v791, %v791
        %v825 = vpack.c.bf16 %v793, %v793
        %v826 = vpack.c.bf16 %v796, %v796
        %v827 = vpack.c.bf16 %v798, %v798
        %v828 = vpack.c.bf16 %v801, %v801
        %v829 = vpack.c.bf16 %v803, %v803
        %v830 = vpack.c.bf16 %v806, %v806
        %v831 = vpack.c.bf16 %v808, %v808
        %v832 = vpack.c.bf16 %v811, %v811
        %v833 = vpack.c.bf16 %v813, %v813
        %v834 = vpack.c.bf16 %v816, %v816
        %v835 = vpack.c.bf16 %v818, %v818
        %836 = vst [vmem:[%s252] sm:$0xf] %v820
        %837 = vst [vmem:[%s252 + $0x4] sm:$0xf] %v821
        %838 = vst [vmem:[%s252 + $0x8] sm:$0xf] %v822
        %839 = vst [vmem:[%s252 + $0xc] sm:$0xf] %v823
        %840 = vst [vmem:[%s252 + $0x10] sm:$0xf] %v824
        %841 = vst [vmem:[%s252 + $0x14] sm:$0xf] %v825
        %842 = vst [vmem:[%s252 + $0x18] sm:$0xf] %v826
        %843 = vst [vmem:[%s252 + $0x1c] sm:$0xf] %v827
        %844 = vst [vmem:[%s252 + $0x20] sm:$0xf] %v828
        %845 = vst [vmem:[%s252 + $0x24] sm:$0xf] %v829
        %846 = vst [vmem:[%s252 + $0x28] sm:$0xf] %v830
        %847 = vst [vmem:[%s252 + $0x2c] sm:$0xf] %v831
        %848 = vst [vmem:[%s252 + $0x30] sm:$0xf] %v832
        %849 = vst [vmem:[%s252 + $0x34] sm:$0xf] %v833
        %850 = vst [vmem:[%s252 + $0x38] sm:$0xf] %v834
        %851 = vst [vmem:[%s252 + $0x3c] sm:$0xf] %v835
      $region44: #{gcn_forward.4} parent=35 // pred_fallthru
        _
      %s852 = smul.u32 16, %s19
      %p853 = scmp.lt.s32.totalorder %s852, 31
      %s854 = scalar_select %p853, %s852, 31
      %s855 = smul.addr %s854, 4
      %s856 = scalar_lea.vmem %s4, %s855
      // Predicated region
      $region45: #{gcn_forward.4} parent=35 // pred_check
        %p857 = pneg %p141
      $region46: #{gcn_forward.4} parent=35 // pred_check_branch
        %859 = sbr.rel (%p857) target = $region48
      $region47: #{gcn_forward.4} parent=35 // pred_region
        %s860 = smul.u32 16, %s19
      $region48: #{gcn_forward.4} parent=35 // pred_fallthru
        _
    $region36: #{gcn_forward.4} parent=5 // pred_fallthru
      _
    %p861 = scmp.le.s32.totalorder 2, %s10
    // Predicated region
    $region49: #{gcn_forward.4} parent=5 // pred_check
      %p862 = pneg %p861
    $region50: #{gcn_forward.4} parent=5 // pred_check_branch
      %864 = sbr.rel (%p862) target = $region52
    $region51: #{gcn_forward.4} parent=5 // pred_region
      %s865 = ssub.s32 %s10, 2
      // Predicated region
      $region53: #{gcn_forward.4} parent=51 // pred_check
        %p866 = pneg %p147
      $region54: #{gcn_forward.4} parent=51 // pred_check_branch
        %868 = sbr.rel (%p866) target = $region56
      $region55: #{gcn_forward.4} parent=51 // pred_region
        %s869 = smul.u32 16, %s21
        %p870 = scmp.lt.s32.totalorder %s869, 31
        %s871 = scalar_select %p870, %s869, 31
        %s872 = smul.addr %s871, 4
        %s873 = scalar_lea.vmem %s4, %s872
      $region56: #{gcn_forward.4} parent=51 // pred_fallthru
        _
    $region52: #{gcn_forward.4} parent=5 // pred_fallthru
      _
  $region6: #{gcn_forward.4} parent=0 // loop_footer
    %s14 = sadd.s32 1, %s10
  $region7: #{gcn_forward.4} parent=0 // loop_footer_branch
    %9 = sbr.rel target = $region3
  $region8: #{gcn_forward.4} parent=0 // loop_exit
    _

</llo_original>
